<compile_context>
chip_gen: v6e
topology: v6e:2x2x1
jax: 0.10.0
libtpu: 0.0.40
codegen_flags: <defaults>
</compile_context>

<pallas_src>
import functools

import jax
import jax.numpy as jnp
from jax import lax
from jax.experimental import pallas as pl
from jax.experimental.pallas import tpu as pltpu


def _round_up(v, mult):
    return (v + mult - 1) // mult * mult


def _norm_softmax_loss_kernel(x_ref, out_ref, col_sum_ref, row_sum_ref, *,
                              inv_t, n_diag, n_rows, n_cols,
                              block_rows, block_cols, mask_rows, mask_cols):
    i = pl.program_id(0)            # row-tile index (outer)
    j = pl.program_id(1)            # col-tile index (inner)
    n_i = pl.num_programs(0)
    n_j = pl.num_programs(1)
    row0 = i * block_rows
    col0 = j * block_cols

    @pl.when((i == 0) & (j == 0))
    def _init():
        out_ref[...] = jnp.zeros_like(out_ref)
        col_sum_ref[...] = jnp.zeros_like(col_sum_ref)

    @pl.when(j == 0)
    def _row_init():
        row_sum_ref[...] = jnp.zeros_like(row_sum_ref)

    # Scale by 1/T (reciprocal multiply) and do ONE exp pass per element,
    # shifted by the constant upper bound 1/T (|x| <= 1  =>  x/T - 1/T <= 0).
    s = x_ref[...].astype(jnp.float32) * inv_t                       # (TM, TC)
    p = jnp.exp(s - inv_t)                                           # (TM, TC)

    # Ragged tails are masked in-kernel (no jnp.pad HBM copy); masks are only
    # emitted when the cdiv grid actually overhangs the array in that dim.
    if mask_rows or mask_cols:
        valid = None
        if mask_rows:
            valid = (row0 + lax.broadcasted_iota(jnp.int32, (block_rows, 1), 0)) < n_rows
        if mask_cols:
            c_ok = (col0 + lax.broadcasted_iota(jnp.int32, (1, block_cols), 1)) < n_cols
            valid = c_ok if valid is None else (valid & c_ok)
        p = jnp.where(valid, p, 0.0)   # where (not *): OOB garbage may be inf/NaN

    # Row partial sums (XLU lane reduce), accumulated across column tiles.
    row_sum_ref[...] += jnp.sum(p, axis=1, keepdims=True)            # (TM, 1)

    # Column partial sums on the (otherwise idle) MXU, accumulated across row
    # tiles.  HIGHEST precision keeps the downstream log at ~f32 accuracy.
    ones_row = jnp.ones((1, block_rows), jnp.float32)
    col_part = jnp.dot(ones_row, p, precision=lax.Precision.HIGHEST,
                       preferred_element_type=jnp.float32)           # (1, TC)
    col_sum_ref[j] += col_part

    # Diagonal term, only for tiles that actually intersect the main diagonal.
    diag_hit = ((row0 < col0 + block_cols) & (col0 < row0 + block_rows)
                & (row0 < n_diag) & (col0 < n_diag))

    @pl.when(diag_hit)
    def _diag():
        gr = row0 + lax.broadcasted_iota(jnp.int32, (block_rows, block_cols), 0)
        gc = col0 + lax.broadcasted_iota(jnp.int32, (block_rows, block_cols), 1)
        dmask = (gr == gc) & (gr < n_diag)
        out_ref[...] += -2.0 * jnp.sum(jnp.where(dmask, s, 0.0))

    # Row LSEs are complete once this row tile has seen every column tile.
    @pl.when((j == n_j - 1) & (row0 < n_diag))
    def _row_fin():
        row_lse = inv_t + jnp.log(row_sum_ref[...])                  # (TM, 1)
        r_valid = (row0 + lax.broadcasted_iota(jnp.int32, (block_rows, 1), 0)) < n_diag
        out_ref[...] += jnp.sum(jnp.where(r_valid, row_lse, 0.0))

    # Column LSEs are complete once this column tile has seen every row tile.
    @pl.when((i == n_i - 1) & (col0 < n_diag))
    def _col_fin():
        col_lse = inv_t + jnp.log(col_sum_ref[j])                    # (1, TC)
        c_valid = (col0 + lax.broadcasted_iota(jnp.int32, (1, block_cols), 1)) < n_diag
        out_ref[...] += jnp.sum(jnp.where(c_valid, col_lse, 0.0))

    @pl.when((i == n_i - 1) & (j == n_j - 1))
    def _scale():
        out_ref[...] = out_ref[...] * (1.0 / n_diag)


def _choose_tiles(n, m, itemsize, budget, block_rows, block_cols):
    """Pick (TM, TC) so 2x double-buffered input + f32 temporaries + scratch
    stay under `budget`; shrink the column tile before letting TM collapse."""
    m128 = _round_up(m, 128)
    n8 = _round_up(n, 8)

    if block_cols is not None:
        tc = int(block_cols)
        assert tc % 128 == 0, "block_cols must be a multiple of 128"
        tc = min(tc, m128)
    else:
        tc = min(2048, m128)

    def fit_tm(tc_):
        n_ct = -(-m // tc_)
        fixed = n_ct * 8 * tc_ * 4 + (1 << 16)             # col-sum scratch + slack
        per_row = (2 * itemsize + 5 * 4) * tc_ + 128 * 4   # 2x input bufs + f32 temps + row-sum
        tm_ = max((budget - fixed) // per_row, 8)
        tm_ = min(tm_, 1024)
        if tm_ >= n8:
            return n8                                      # whole row extent in one tile
        if tm_ >= 128:
            return (tm_ // 128) * 128
        return max(8, (tm_ // 8) * 8)

    if block_rows is not None:
        tm = int(block_rows)
        assert tm % 8 == 0, "block_rows must be a multiple of 8"
        tm = min(tm, n8)
    else:
        tm = fit_tm(tc)
        while tm < 128 and tc > 128 and n8 >= 128:         # shrink cols, not rows
            tc = max(128, tc // 2)
            tm = fit_tm(tc)
    return tm, tc


def norm_softmax_loss(x, temperature=0.05, block_rows=None, block_cols=None):
    """x: (N, M) cosine-similarity matrix (f32 or bf16), values in [-1, 1].
    Returns the scalar NormSoftmaxLoss (float32).  Requires temperature >~ 0.02
    for the constant-shift single-exp LSE (see header note)."""
    n, m = x.shape
    n_diag = min(n, m)
    inv_t = 1.0 / float(temperature)
    itemsize = jnp.dtype(x.dtype).itemsize

    # Generation-gated VMEM budget: ~half of physical VMEM as the scoped limit
    # (64 MiB on v5e/v6e with 128 MiB, 32 MiB on v7x with 64 MiB); 3/4 for tiles.
    try:
        vmem_cap = int(pltpu.get_tpu_info().vmem_capacity_bytes)
    except Exception:
        vmem_cap = 64 * 1024 * 1024        # conservative (v7x-sized) fallback
    vmem_limit = min(vmem_cap // 2, 64 * 1024 * 1024)
    budget = (vmem_limit * 3) // 4

    tm, tc = _choose_tiles(n, m, itemsize, budget, block_rows, block_cols)
    grid = (pl.cdiv(n, tm), pl.cdiv(m, tc))

    kernel = functools.partial(
        _norm_softmax_loss_kernel,
        inv_t=inv_t, n_diag=n_diag, n_rows=n, n_cols=m,
        block_rows=tm, block_cols=tc,
        mask_rows=(n % tm) != 0, mask_cols=(m % tc) != 0)

    out = pl.pallas_call(
        kernel,
        out_shape=jax.ShapeDtypeStruct((1, 1), jnp.float32),
        grid=grid,
        in_specs=[pl.BlockSpec((tm, tc), lambda i, j: (i, j))],
        out_specs=pl.BlockSpec((1, 1), lambda i, j: (0, 0)),   # resident scalar accumulator
        scratch_shapes=[
            pltpu.VMEM((grid[1], 1, tc), jnp.float32),  # per-col-tile streaming sums
            pltpu.VMEM((tm, 1), jnp.float32),           # row sums across column tiles
        ],
        compiler_params=pltpu.CompilerParams(
            # Both axes carry serial reductions (col sums over rows, row sums
            # over cols).  TODO(synk): v7x megacore split of the row axis with
            # per-core partials.
            dimension_semantics=("arbitrary", "arbitrary"),
            vmem_limit_bytes=int(vmem_limit),
        ),
    )(x)
    return out[0, 0]


def norm_softmax_loss_ref(x, temperature=0.05):
    """Pure-JAX reference mirroring the PyTorch forward."""
    x = x.astype(jnp.float32)
    i_sim = x / temperature
    i_sim = i_sim - jnp.max(i_sim, axis=1, keepdims=True)
    i_logsm = jax.nn.log_softmax(i_sim, axis=1)
    j_sim = x.T / temperature
    j_sim = j_sim - jnp.max(j_sim, axis=1, keepdims=True)
    j_logsm = jax.nn.log_softmax(j_sim, axis=1)
    idiag = jnp.diagonal(i_logsm)
    jdiag = jnp.diagonal(j_logsm)
    loss_i = idiag.sum() / idiag.shape[0]
    loss_j = jdiag.sum() / jdiag.shape[0]
    return -loss_i - loss_j


def _make_similarity(key, n, m, hidden, dtype=jnp.float32):
    k1, k2 = jax.random.split(key)
    a = jax.random.normal(k1, (n, hidden), dtype=jnp.float32)
    b = jax.random.normal(k2, (m, hidden), dtype=jnp.float32)
    a = a / jnp.linalg.norm(a, axis=-1, keepdims=True)
    b = b / jnp.linalg.norm(b, axis=-1, keepdims=True)
    return (a @ b.T).astype(dtype)          # (N, M) cosine sims in [-1, 1]


if __name__ == "__main__":
    key = jax.random.PRNGKey(0)
    k1, k2, k3 = jax.random.split(key, 3)

    # Case 1: 200x200 f32 with forced 128x128 tiles -> 2x2 grid; exercises both
    # ragged masks, streaming row/col sums, diagonal gating and both finalizes.
    x1 = _make_similarity(k1, 200, 200, 64, jnp.float32)
    out1 = jax.block_until_ready(
        norm_softmax_loss(x1, 0.05, block_rows=128, block_cols=128))
    ref1 = norm_softmax_loss_ref(x1, 0.05)
    assert jnp.allclose(out1, ref1, rtol=1e-4, atol=5e-4), (out1, ref1)

    # Case 2: rectangular bf16 (N != M -> n_diag = 160), default tile sizing
    # (single tile, column overhang masked in-kernel).
    x2 = _make_similarity(k2, 160, 224, 64, jnp.bfloat16)
    out2 = jax.block_until_ready(norm_softmax_loss(x2, 0.05))
    ref2 = norm_softmax_loss_ref(x2, 0.05)
    assert jnp.allclose(out2, ref2, rtol=1e-4, atol=5e-4), (out2, ref2)

    # Case 3: clean 256x256 f32, default sizing -> unmasked fast path.
    x3 = _make_similarity(k3, 256, 256, 64, jnp.float32)
    out3 = jax.block_until_ready(norm_softmax_loss(x3, 0.05))
    ref3 = norm_softmax_loss_ref(x3, 0.05)
    assert jnp.allclose(out3, ref3, rtol=1e-4, atol=5e-4), (out3, ref3)

    print("KERNEL_OK")
</pallas_src>

<mosaic_0001>
module attributes {stable_mosaic.version = 11 : i64} {
  func.func @_norm_softmax_loss_kernel(%arg0: i32, %arg1: i32, %arg2: memref<128x128xf32, #tpu.memory_space<vmem>>, %arg3: memref<1x1xf32, #tpu.memory_space<vmem>>, %arg4: memref<2x1x128xf32, #tpu.memory_space<vmem>>, %arg5: memref<128x1xf32, #tpu.memory_space<vmem>>) attributes {dimension_semantics = [#tpu.dimension_semantics<arbitrary>, #tpu.dimension_semantics<arbitrary>], iteration_bounds = array<i64: 2, 2>, scalar_prefetch = 0 : i64, scratch_operands = 2 : i64, tpu.core_type = #tpu.core_type<tc>, window_params = [{transform_indices = @transform_0, window_bounds = array<i64: 128, 128>}, {pipeline_mode = #tpu.pipeline_mode<synchronous>, transform_indices = @transform_1, window_bounds = array<i64: 1, 1>}]} {
    %c128_i32 = arith.constant 128 : i32
    %0 = arith.muli %arg0, %c128_i32 : i32
    %c128_i32_0 = arith.constant 128 : i32
    %1 = arith.muli %arg1, %c128_i32_0 : i32
    %c0_i32 = arith.constant 0 : i32
    %2 = arith.cmpi eq, %arg0, %c0_i32 : i32
    %c0_i32_1 = arith.constant 0 : i32
    %3 = arith.cmpi eq, %arg1, %c0_i32_1 : i32
    %4 = arith.andi %2, %3 : i1
    %5 = arith.extui %4 : i1 to i32
    %c0_i32_2 = arith.constant 0 : i32
    %6 = arith.cmpi ne, %5, %c0_i32_2 : i32
    scf.if %6 {
      %cst_33 = arith.constant 0.000000e+00 : f32
      %72 = vector.broadcast %cst_33 : f32 to vector<1x1xf32>
      %c0_34 = arith.constant 0 : index
      %c0_35 = arith.constant 0 : index
      %73 = vector.load %arg3[%c0_34, %c0_35] : memref<1x1xf32, #tpu.memory_space<vmem>>, vector<1x1xf32>
      tpu.vector_store %arg3[%c0_34, %c0_35], %72 {strides = array<i32>} : memref<1x1xf32, #tpu.memory_space<vmem>>, vector<1x1xf32>,
      %cst_36 = arith.constant 0.000000e+00 : f32
      %74 = vector.broadcast %cst_36 : f32 to vector<2x1x128xf32>
      %c0_37 = arith.constant 0 : index
      %c0_38 = arith.constant 0 : index
      %c0_39 = arith.constant 0 : index
      %75 = vector.load %arg4[%c0_37, %c0_38, %c0_39] : memref<2x1x128xf32, #tpu.memory_space<vmem>>, vector<2x1x128xf32>
      tpu.vector_store %arg4[%c0_37, %c0_38, %c0_39], %74 {strides = array<i32>} : memref<2x1x128xf32, #tpu.memory_space<vmem>>, vector<2x1x128xf32>,
    } else {
    }
    %c0_i32_3 = arith.constant 0 : i32
    %7 = arith.cmpi eq, %arg1, %c0_i32_3 : i32
    %8 = arith.extui %7 : i1 to i32
    %c0_i32_4 = arith.constant 0 : i32
    %9 = arith.cmpi ne, %8, %c0_i32_4 : i32
    scf.if %9 {
      %cst_33 = arith.constant 0.000000e+00 : f32
      %72 = vector.broadcast %cst_33 : f32 to vector<128x1xf32>
      %c0_34 = arith.constant 0 : index
      %c0_35 = arith.constant 0 : index
      %73 = vector.load %arg5[%c0_34, %c0_35] : memref<128x1xf32, #tpu.memory_space<vmem>>, vector<128x1xf32>
      tpu.vector_store %arg5[%c0_34, %c0_35], %72 {strides = array<i32>} : memref<128x1xf32, #tpu.memory_space<vmem>>, vector<128x1xf32>,
    } else {
    }
    %c0 = arith.constant 0 : index
    %c0_5 = arith.constant 0 : index
    %10 = vector.load %arg2[%c0, %c0_5] : memref<128x128xf32, #tpu.memory_space<vmem>>, vector<128x128xf32>
    %cst = arith.constant 2.000000e+01 : f32
    %11 = vector.broadcast %cst : f32 to vector<128x128xf32>
    %12 = arith.mulf %10, %11 : vector<128x128xf32>
    %cst_6 = arith.constant 2.000000e+01 : f32
    %13 = vector.broadcast %cst_6 : f32 to vector<128x128xf32>
    %14 = arith.subf %12, %13 : vector<128x128xf32>
    %15 = math.exp %14 : vector<128x128xf32>
    %16 = tpu.iota {dimensions = array<i32: 0>} : vector<128x1xi32>
    %17 = vector.broadcast %0 : i32 to vector<128x1xi32>
    %18 = arith.addi %17, %16 : vector<128x1xi32>
    %c200_i32 = arith.constant 200 : i32
    %19 = vector.broadcast %c200_i32 : i32 to vector<128x1xi32>
    %20 = arith.cmpi slt, %18, %19 : vector<128x1xi32>
    %21 = tpu.iota {dimensions = array<i32: 1>} : vector<1x128xi32>
    %22 = vector.broadcast %1 : i32 to vector<1x128xi32>
    %23 = arith.addi %22, %21 : vector<1x128xi32>
    %c200_i32_7 = arith.constant 200 : i32
    %24 = vector.broadcast %c200_i32_7 : i32 to vector<1x128xi32>
    %25 = arith.cmpi slt, %23, %24 : vector<1x128xi32>
    %26 = vector.broadcast %20 : vector<128x1xi1> to vector<128x128xi1>
    %27 = vector.broadcast %25 : vector<1x128xi1> to vector<128x128xi1>
    %28 = arith.andi %26, %27 : vector<128x128xi1>
    %cst_8 = arith.constant 0.000000e+00 : f32
    %29 = vector.broadcast %cst_8 : f32 to vector<128x128xf32>
    %30 = arith.select %28, %15, %29 : vector<128x128xi1>, vector<128x128xf32>
    %c0_9 = arith.constant 0 : index
    %c0_10 = arith.constant 0 : index
    %31 = vector.load %arg5[%c0_9, %c0_10] : memref<128x1xf32, #tpu.memory_space<vmem>>, vector<128x1xf32>
    %cst_11 = arith.constant dense<0.000000e+00> : vector<128xf32>
    %32 = vector.multi_reduction <add>, %30, %cst_11 [1] : vector<128x128xf32> to vector<128xf32>
    %33 = vector.shape_cast %32 : vector<128xf32> to vector<128x1xf32>
    %34 = arith.addf %31, %33 : vector<128x1xf32>
    %c0_12 = arith.constant 0 : index
    %c0_13 = arith.constant 0 : index
    %35 = vector.load %arg5[%c0_12, %c0_13] : memref<128x1xf32, #tpu.memory_space<vmem>>, vector<128x1xf32>
    tpu.vector_store %arg5[%c0_12, %c0_13], %34 {strides = array<i32>} : memref<128x1xf32, #tpu.memory_space<vmem>>, vector<128x1xf32>,
    %cst_14 = arith.constant 1.000000e+00 : f32
    %36 = vector.broadcast %cst_14 : f32 to vector<1x128xf32>
    %cst_15 = arith.constant dense<0.000000e+00> : vector<1x128xf32>
    %37 = tpu.matmul %36, %30, %cst_15 {dimension_numbers = #tpu.dot_dimension_numbers<[1], [0], [0], [1], [0, 0, 1, 1], [], []>, precision = #tpu.contract_precision<fp32>} : vector<1x128xf32>, vector<128x128xf32>, vector<1x128xf32> -> vector<1x128xf32>
    %38 = arith.index_cast %arg1 : i32 to index
    %c0_16 = arith.constant 0 : index
    %c0_17 = arith.constant 0 : index
    %39 = vector.load %arg4[%38, %c0_16, %c0_17] : memref<2x1x128xf32, #tpu.memory_space<vmem>>, vector<1x1x128xf32>
    %40 = vector.shape_cast %39 : vector<1x1x128xf32> to vector<1x128xf32>
    %41 = arith.addf %40, %37 : vector<1x128xf32>
    %42 = arith.index_cast %arg1 : i32 to index
    %c0_18 = arith.constant 0 : index
    %c0_19 = arith.constant 0 : index
    %43 = vector.load %arg4[%42, %c0_18, %c0_19] : memref<2x1x128xf32, #tpu.memory_space<vmem>>, vector<1x1x128xf32>
    %44 = vector.shape_cast %43 : vector<1x1x128xf32> to vector<1x128xf32>
    %45 = vector.shape_cast %41 : vector<1x128xf32> to vector<1x1x128xf32>
    tpu.vector_store %arg4[%42, %c0_18, %c0_19], %45 {strides = array<i32>} : memref<2x1x128xf32, #tpu.memory_space<vmem>>, vector<1x1x128xf32>,
    %c128_i32_20 = arith.constant 128 : i32
    %46 = arith.addi %1, %c128_i32_20 : i32
    %47 = arith.cmpi slt, %0, %46 : i32
    %c128_i32_21 = arith.constant 128 : i32
    %48 = arith.addi %0, %c128_i32_21 : i32
    %49 = arith.cmpi slt, %1, %48 : i32
    %50 = arith.andi %47, %49 : i1
    %c200_i32_22 = arith.constant 200 : i32
    %51 = arith.cmpi slt, %0, %c200_i32_22 : i32
    %52 = arith.andi %50, %51 : i1
    %c200_i32_23 = arith.constant 200 : i32
    %53 = arith.cmpi slt, %1, %c200_i32_23 : i32
    %54 = arith.andi %52, %53 : i1
    %55 = arith.extui %54 : i1 to i32
    %c0_i32_24 = arith.constant 0 : i32
    %56 = arith.cmpi ne, %55, %c0_i32_24 : i32
    scf.if %56 {
      %72 = tpu.iota {dimensions = array<i32: 0>} : vector<128x128xi32>
      %73 = vector.broadcast %0 : i32 to vector<128x128xi32>
      %74 = arith.addi %73, %72 : vector<128x128xi32>
      %75 = tpu.iota {dimensions = array<i32: 1>} : vector<128x128xi32>
      %76 = vector.broadcast %1 : i32 to vector<128x128xi32>
      %77 = arith.addi %76, %75 : vector<128x128xi32>
      %78 = arith.cmpi eq, %74, %77 : vector<128x128xi32>
      %c200_i32_33 = arith.constant 200 : i32
      %79 = vector.broadcast %c200_i32_33 : i32 to vector<128x128xi32>
      %80 = arith.cmpi slt, %74, %79 : vector<128x128xi32>
      %81 = arith.andi %78, %80 : vector<128x128xi1>
      %c0_34 = arith.constant 0 : index
      %c0_35 = arith.constant 0 : index
      %82 = vector.load %arg3[%c0_34, %c0_35] : memref<1x1xf32, #tpu.memory_space<vmem>>, vector<1x1xf32>
      %cst_36 = arith.constant 0.000000e+00 : f32
      %83 = vector.broadcast %cst_36 : f32 to vector<128x128xf32>
      %84 = arith.select %81, %12, %83 : vector<128x128xi1>, vector<128x128xf32>
      %85 = vector.shape_cast %84 : vector<128x128xf32> to vector<1x128x128xf32>
      %cst_37 = arith.constant dense<0.000000e+00> : vector<1xf32>
      %86 = vector.multi_reduction <add>, %85, %cst_37 [1, 2] : vector<1x128x128xf32> to vector<1xf32>
      %87 = vector.shape_cast %86 : vector<1xf32> to vector<1x1x1xf32>
      %88 = vector.extract %87[0, 0, 0] : f32 from vector<1x1x1xf32>
      %cst_38 = arith.constant -2.000000e+00 : f32
      %89 = arith.mulf %cst_38, %88 : f32
      %90 = vector.broadcast %89 : f32 to vector<1x1xf32>
      %91 = arith.addf %82, %90 : vector<1x1xf32>
      %c0_39 = arith.constant 0 : index
      %c0_40 = arith.constant 0 : index
      %92 = vector.load %arg3[%c0_39, %c0_40] : memref<1x1xf32, #tpu.memory_space<vmem>>, vector<1x1xf32>
      tpu.vector_store %arg3[%c0_39, %c0_40], %91 {strides = array<i32>} : memref<1x1xf32, #tpu.memory_space<vmem>>, vector<1x1xf32>,
    } else {
    }
    %c1_i32 = arith.constant 1 : i32
    %57 = arith.cmpi eq, %arg1, %c1_i32 : i32
    %c200_i32_25 = arith.constant 200 : i32
    %58 = arith.cmpi slt, %0, %c200_i32_25 : i32
    %59 = arith.andi %57, %58 : i1
    %60 = arith.extui %59 : i1 to i32
    %c0_i32_26 = arith.constant 0 : i32
    %61 = arith.cmpi ne, %60, %c0_i32_26 : i32
    scf.if %61 {
      %c0_33 = arith.constant 0 : index
      %c0_34 = arith.constant 0 : index
      %72 = vector.load %arg5[%c0_33, %c0_34] : memref<128x1xf32, #tpu.memory_space<vmem>>, vector<128x1xf32>
      %73 = math.log %72 : vector<128x1xf32>
      %cst_35 = arith.constant 2.000000e+01 : f32
      %74 = vector.broadcast %cst_35 : f32 to vector<128x1xf32>
      %75 = arith.addf %74, %73 : vector<128x1xf32>
      %76 = tpu.iota {dimensions = array<i32: 0>} : vector<128x1xi32>
      %77 = vector.broadcast %0 : i32 to vector<128x1xi32>
      %78 = arith.addi %77, %76 : vector<128x1xi32>
      %c200_i32_36 = arith.constant 200 : i32
      %79 = vector.broadcast %c200_i32_36 : i32 to vector<128x1xi32>
      %80 = arith.cmpi slt, %78, %79 : vector<128x1xi32>
      %c0_37 = arith.constant 0 : index
      %c0_38 = arith.constant 0 : index
      %81 = vector.load %arg3[%c0_37, %c0_38] : memref<1x1xf32, #tpu.memory_space<vmem>>, vector<1x1xf32>
      %cst_39 = arith.constant 0.000000e+00 : f32
      %82 = vector.broadcast %cst_39 : f32 to vector<128x1xf32>
      %83 = arith.select %80, %75, %82 : vector<128x1xi1>, vector<128x1xf32>
      %84 = vector.shape_cast %83 : vector<128x1xf32> to vector<1x128x1xf32>
      %cst_40 = arith.constant dense<0.000000e+00> : vector<1xf32>
      %85 = vector.multi_reduction <add>, %84, %cst_40 [1, 2] : vector<1x128x1xf32> to vector<1xf32>
      %86 = vector.shape_cast %85 : vector<1xf32> to vector<1x1x1xf32>
      %87 = vector.extract %86[0, 0, 0] : f32 from vector<1x1x1xf32>
      %88 = vector.broadcast %87 : f32 to vector<1x1xf32>
      %89 = arith.addf %81, %88 : vector<1x1xf32>
      %c0_41 = arith.constant 0 : index
      %c0_42 = arith.constant 0 : index
      %90 = vector.load %arg3[%c0_41, %c0_42] : memref<1x1xf32, #tpu.memory_space<vmem>>, vector<1x1xf32>
      tpu.vector_store %arg3[%c0_41, %c0_42], %89 {strides = array<i32>} : memref<1x1xf32, #tpu.memory_space<vmem>>, vector<1x1xf32>,
    } else {
    }
    %c1_i32_27 = arith.constant 1 : i32
    %62 = arith.cmpi eq, %arg0, %c1_i32_27 : i32
    %c200_i32_28 = arith.constant 200 : i32
    %63 = arith.cmpi slt, %1, %c200_i32_28 : i32
    %64 = arith.andi %62, %63 : i1
    %65 = arith.extui %64 : i1 to i32
    %c0_i32_29 = arith.constant 0 : i32
    %66 = arith.cmpi ne, %65, %c0_i32_29 : i32
    scf.if %66 {
      %72 = arith.index_cast %arg1 : i32 to index
      %c0_33 = arith.constant 0 : index
      %c0_34 = arith.constant 0 : index
      %73 = vector.load %arg4[%72, %c0_33, %c0_34] : memref<2x1x128xf32, #tpu.memory_space<vmem>>, vector<1x1x128xf32>
      %74 = vector.shape_cast %73 : vector<1x1x128xf32> to vector<1x128xf32>
      %75 = math.log %74 : vector<1x128xf32>
      %cst_35 = arith.constant 2.000000e+01 : f32
      %76 = vector.broadcast %cst_35 : f32 to vector<1x128xf32>
      %77 = arith.addf %76, %75 : vector<1x128xf32>
      %78 = tpu.iota {dimensions = array<i32: 1>} : vector<1x128xi32>
      %79 = vector.broadcast %1 : i32 to vector<1x128xi32>
      %80 = arith.addi %79, %78 : vector<1x128xi32>
      %c200_i32_36 = arith.constant 200 : i32
      %81 = vector.broadcast %c200_i32_36 : i32 to vector<1x128xi32>
      %82 = arith.cmpi slt, %80, %81 : vector<1x128xi32>
      %c0_37 = arith.constant 0 : index
      %c0_38 = arith.constant 0 : index
      %83 = vector.load %arg3[%c0_37, %c0_38] : memref<1x1xf32, #tpu.memory_space<vmem>>, vector<1x1xf32>
      %cst_39 = arith.constant 0.000000e+00 : f32
      %84 = vector.broadcast %cst_39 : f32 to vector<1x128xf32>
      %85 = arith.select %82, %77, %84 : vector<1x128xi1>, vector<1x128xf32>
      %86 = vector.shape_cast %85 : vector<1x128xf32> to vector<1x1x128xf32>
      %cst_40 = arith.constant dense<0.000000e+00> : vector<1xf32>
      %87 = vector.multi_reduction <add>, %86, %cst_40 [1, 2] : vector<1x1x128xf32> to vector<1xf32>
      %88 = vector.shape_cast %87 : vector<1xf32> to vector<1x1x1xf32>
      %89 = vector.extract %88[0, 0, 0] : f32 from vector<1x1x1xf32>
      %90 = vector.broadcast %89 : f32 to vector<1x1xf32>
      %91 = arith.addf %83, %90 : vector<1x1xf32>
      %c0_41 = arith.constant 0 : index
      %c0_42 = arith.constant 0 : index
      %92 = vector.load %arg3[%c0_41, %c0_42] : memref<1x1xf32, #tpu.memory_space<vmem>>, vector<1x1xf32>
      tpu.vector_store %arg3[%c0_41, %c0_42], %91 {strides = array<i32>} : memref<1x1xf32, #tpu.memory_space<vmem>>, vector<1x1xf32>,
    } else {
    }
    %c1_i32_30 = arith.constant 1 : i32
    %67 = arith.cmpi eq, %arg0, %c1_i32_30 : i32
    %c1_i32_31 = arith.constant 1 : i32
    %68 = arith.cmpi eq, %arg1, %c1_i32_31 : i32
    %69 = arith.andi %67, %68 : i1
    %70 = arith.extui %69 : i1 to i32
    %c0_i32_32 = arith.constant 0 : i32
    %71 = arith.cmpi ne, %70, %c0_i32_32 : i32
    scf.if %71 {
      %c0_33 = arith.constant 0 : index
      %c0_34 = arith.constant 0 : index
      %72 = vector.load %arg3[%c0_33, %c0_34] : memref<1x1xf32, #tpu.memory_space<vmem>>, vector<1x1xf32>
      %cst_35 = arith.constant 5.000000e-03 : f32
      %73 = vector.broadcast %cst_35 : f32 to vector<1x1xf32>
      %74 = arith.mulf %72, %73 : vector<1x1xf32>
      %c0_36 = arith.constant 0 : index
      %c0_37 = arith.constant 0 : index
      %75 = vector.load %arg3[%c0_36, %c0_37] : memref<1x1xf32, #tpu.memory_space<vmem>>, vector<1x1xf32>
      tpu.vector_store %arg3[%c0_36, %c0_37], %74 {strides = array<i32>} : memref<1x1xf32, #tpu.memory_space<vmem>>, vector<1x1xf32>,
    } else {
    }
    return
  }
  func.func @transform_0(%arg0: i32, %arg1: i32) -> (i32, i32) {
    %c0_i32 = arith.constant 0 : i32
    return %arg0, %arg1 : i32, i32
  }
  func.func @transform_1(%arg0: i32, %arg1: i32) -> (i32, i32) {
    %c0_i32 = arith.constant 0 : i32
    %c0_i32_0 = arith.constant 0 : i32
    %c0_i32_1 = arith.constant 0 : i32
    return %c0_i32, %c0_i32_0 : i32, i32
  }
}

</mosaic_0001>

<llo_original>
// kernel: tpu_custom_call.1
$region0: #{tpu_custom_call.1}
  #allocation0 [shape = 'u32[]', space=smem, size = 0x4, offset = 0x4, fixed_abs, tag = 'smem constant byte address 0x4 - core index']
  #allocation1 [shape = 'u32[144,128]{1,0:T(1,128)}', space=vmem, size = 0x12000, scoped, tag = 'internal scratch']
  #allocation2 [shape = 'f32[2,1,128]{2,1,0:T(1,128)}', space=vmem, size = 0x400, scoped, tag = 'scratch operand']
  #allocation3 [shape = 'f32[128,1]{1,0:T(8,128)}', space=vmem, size = 0x10000, scoped, tag = 'scratch operand']
  %s0 = inlined_call_operand.hbm [shape: f32[200,200], index: 0, kind: input, shape index: {}]
  %s1 = inlined_call_operand.hbm [shape: f32[1,1], index: 1, kind: output, shape index: {}]
  %s2 = sld [smem:[#allocation0]]
  $region65: #{tpu_custom_call.1} parent=0
    _
  %s4 = ssub.s32 1, %s2
  %s5 = scalar_select 0, %s4, %s2
  $region1: #{tpu_custom_call.1} parent=0
    #allocation4 [shape = 'u8[131072]{0}', space=vmem, size = 0x20000, scoped, tag = 'input window, operand 0']
    #allocation5 [shape = 's32[2]{0}', space=sflag, size = 0x8, scoped, tag = 'scoped memory for tpu_custom_call.1']
    #allocation6 [shape = 's32[2]{0}', space=sflag, size = 0x8, scoped, tag = 'scoped memory for tpu_custom_call.1']
    #allocation7 [shape = 'u8[512]{0}', space=vmem, size = 0x400, scoped, tag = 'output window, operand 0, single buffered']
    %6 = vsyncpa [#allocation5], 0
    %s7 = scalar_lea.sflag [#allocation5], 1
    %8 = vsyncpa %s7, 0
    %9 = vsyncpa [#allocation6], 0
    loop: start=0, step=1, limit=6
    $region2: #{tpu_custom_call.1} parent=1 // loop_pre_header
      _
    $region3: #{tpu_custom_call.1} parent=1 // loop_header
      %s11 = sphi 0, %s15
      %p12 = scmp.ge.s32.totalorder %s11, 6
      %s18 = sphi 0, %s30
      %s19 = sphi 0, %s26
      %s20 = sphi 0, %s18
      %s21 = sphi 0, %s19
      %s22 = sphi 0, %s20
      %s23 = sphi 0, %s21
      %s35 = sphi 0, %s37
      %s38 = sphi 0, %s35
      %s39 = sphi 0, %s38
      %s55 = sphi 0, %s39
      %s59 = sphi 0, %s59
      %s61 = sphi 0, %s59
      %s62 = sphi 0, %s61
      %s76 = sphi 0, %s62
    $region4: #{tpu_custom_call.1} parent=1 // loop_header_branch
      %14 = sbr.rel (%p12) target = $region8
    $region5: #{tpu_custom_call.1} parent=1 // loop_body
      %s16 = ssub.s32 %s11, 1
      %s17 = ssub.s32 %s11, 2
      %s24 = sadd.s32 1, %s19
      %p25 = scmp.ge.s32.totalorder %s24, 2
      %s26 = scalar_select %p25, 0, %s24
      %s27 = sadd.s32 1, %s18
      %s28 = scalar_select %p25, %s27, %s18
      %p29 = scmp.ge.s32.totalorder %s28, 2
      %s30 = scalar_select %p29, 0, %s28
      %s31 = ssub.s32 %s18, %s30
      %s32 = ssub.s32 %s19, %s26
      %s33 = sor.u32 %s31, %s32
      %p34 = scmp.eq.s32.totalorder %s33, 0
      %s36 = sadd.s32 %s35, 1
      %s37 = scalar_select %p34, %s35, %s36
      %p40 = pneg %p34
      %p41 = scmp.eq.s32.totalorder %s11, 3
      %p42 = por %p40, %p41
      %p43 = scmp.ne.s32.totalorder %s35, %s38
      %p44 = scmp.eq.s32.totalorder %s11, 0
      %p45 = por %p43, %p44
      %p46 = scmp.ne.s32.totalorder %s35, %s38
      %p47 = scmp.eq.s32.totalorder %s16, 3
      %p48 = por %p46, %p47
      %p49 = scmp.ne.s32.totalorder %s38, %s39
      %p50 = scmp.eq.s32.totalorder %s16, 0
      %p51 = por %p49, %p50
      %p52 = scmp.ne.s32.totalorder %s38, %s39
      %p53 = scmp.eq.s32.totalorder %s17, 3
      %p54 = por %p52, %p53
      %p56 = scmp.ne.s32.totalorder %s39, %s55
      %p57 = scmp.eq.s32.totalorder %s17, 0
      %p58 = por %p56, %p57
      %s60 = sadd.s32 %s59, 1
      %p63 = scmp.eq.s32.totalorder %s11, 3
      %p64 = scmp.ne.s32.totalorder %s59, %s61
      %p65 = scmp.eq.s32.totalorder %s11, 0
      %p66 = por %p64, %p65
      %p67 = scmp.ne.s32.totalorder %s59, %s61
      %p68 = scmp.eq.s32.totalorder %s16, 3
      %p69 = por %p67, %p68
      %p70 = scmp.ne.s32.totalorder %s61, %s62
      %p71 = scmp.eq.s32.totalorder %s16, 0
      %p72 = por %p70, %p71
      %p73 = scmp.ne.s32.totalorder %s61, %s62
      %p74 = scmp.eq.s32.totalorder %s17, 3
      %p75 = por %p73, %p74
      %p77 = scmp.ne.s32.totalorder %s62, %s76
      %p78 = scmp.eq.s32.totalorder %s17, 0
      %p79 = por %p77, %p78
      %p80 = scmp.le.s32.totalorder 1, %s11
      %p81 = scmp.lt.s32.totalorder %s11, 5
      %p82 = pnand %p80, %p81
      %p83 = pneg %p82
      // Predicated region
      $region9: #{tpu_custom_call.1} parent=5 // pred_check
        _
      $region10: #{tpu_custom_call.1} parent=5 // pred_check_branch
        %85 = sbr.rel (%p82) target = $region12
      $region11: #{tpu_custom_call.1} parent=5 // pred_region
        %s86 = ssub.s32 %s11, 1
      $region12: #{tpu_custom_call.1} parent=5 // pred_fallthru
        _
      %p87 = scmp.lt.s32.totalorder %s11, 4
      // Predicated region
      $region13: #{tpu_custom_call.1} parent=5 // pred_check
        %p88 = pneg %p87
      $region14: #{tpu_custom_call.1} parent=5 // pred_check_branch
        %90 = sbr.rel (%p88) target = $region16
      $region15: #{tpu_custom_call.1} parent=5 // pred_region
        // Predicated region
        $region17: #{tpu_custom_call.1} parent=15 // pred_check
          %p91 = pneg %p45
        $region18: #{tpu_custom_call.1} parent=15 // pred_check_branch
          %93 = sbr.rel (%p91) target = $region20
        $region19: #{tpu_custom_call.1} parent=15 // pred_region
          %s94 = sand.u32 %s35, 1
          %s95 = scalar_lea.sflag [#allocation5], %s94
          %s96 = sand.u32 %s35, 1
          %s97 = smul.addr %s96, 128
          %s98 = scalar_lea.vmem [#allocation4], %s97
          %s99 = smul.u32 16, %s18
          %s100 = ssub.s32 25, %s99
          %p101 = scmp.lt.s32.totalorder %s100, 16
          %s102 = scalar_select %p101, %s100, 16
          %s103 = smul.u32 128, %s102
          %s105 = ssub.s32 2048, %s103
          %106 = vsyncadd %s95, %s105
          %p107 = scmp.ne.s32.totalorder 0, %s103
          %s108 = smul.addr %s99, 2
          %s109 = sadd.s32 %s19, %s108
          %s110 = smul.addr %s109, 128
          %s111 = scalar_lea.hbm %s0, %s110
          %s112 = smul.u32 8, %s102
          %s113 = sshll.u32 %s98, 4
          %s114 = int_to_ptr.vmem [resolvable:$true] %s113
          %s115 = sshll.u32 %s112, 4
          %119 = dma.hbm_to_vmem [thread:$0]  (%p107), %s111, %s115, %s114, %s95, 256, 128, 8
        $region20: #{tpu_custom_call.1} parent=15 // pred_fallthru
          _
      $region16: #{tpu_custom_call.1} parent=5 // pred_fallthru
        _
      %p120 = scmp.le.s32.totalorder 1, %s11
      %p121 = scmp.lt.s32.totalorder %s11, 5
      %p122 = pnand %p120, %p121
      %p123 = pneg %p122
      // Predicated region
      $region21: #{tpu_custom_call.1} parent=5 // pred_check
        _
      $region22: #{tpu_custom_call.1} parent=5 // pred_check_branch
        %125 = sbr.rel (%p122) target = $region24
      $region23: #{tpu_custom_call.1} parent=5 // pred_region
        %s126 = ssub.s32 %s11, 1
        %s127 = sand.u32 %s38, 1
        %s128 = scalar_lea.sflag [#allocation5], %s127
        %s129 = sand.u32 %s38, 1
        %s130 = smul.addr %s129, 128
        %s131 = scalar_lea.vmem [#allocation4], %s130
        // Predicated region
        $region25: #{tpu_custom_call.1} parent=23 // pred_check
          %p132 = pneg %p51
        $region26: #{tpu_custom_call.1} parent=23 // pred_check_branch
          %134 = sbr.rel (%p132) target = $region28
        $region27: #{tpu_custom_call.1} parent=23 // pred_region
          %135 = dma.done %s128, 2048
        $region28: #{tpu_custom_call.1} parent=23 // pred_fallthru
          _
        %s136 = sand.u32 %s38, 1
        %s137 = scalar_lea.sflag [#allocation5], %s136
        %s138 = sand.u32 %s38, 1
        %s139 = smul.addr %s138, 128
        %s140 = scalar_lea.vmem [#allocation4], %s139
        %p141 = pneg %p51
        %p142 = pneg %p48
        %p143 = pneg %p72
        %p144 = pneg %p69
        %s145 = smul.u32 16, %s20
        %s146 = ssub.s32 25, %s145
        %p147 = scmp.lt.s32.totalorder %s146, 16
        %s148 = scalar_select %p147, %s146, 16
        %s149 = smul.u32 128, %s148
        %s150 = smul.u32 %s20, 128
        %s151 = smul.u32 %s21, 128
        %p152 = scmp.eq.s32.totalorder %s20, 0
        %p153 = scmp.eq.s32.totalorder %s21, 0
        %p154 = pnand %p152, %p153
        %p155 = pneg %p154
        // Predicated region
        $region29: #{tpu_custom_call.1} parent=23 // pred_check
          _
        $region30: #{tpu_custom_call.1} parent=23 // pred_check_branch
          %157 = sbr.rel (%p154) target = $region32
        $region31: #{tpu_custom_call.1} parent=23 // pred_region
          %vm158 = vcmask 0
          %159 = vst.msk [vmem:[#allocation7] sm:$0x1] %vm158, 0.0
          %160 = vst [vmem:[#allocation2] sm:$0x1] 0.0
          %161 = vst [vmem:[#allocation2 + $0x1] sm:$0x1] 0.0
        $region32: #{tpu_custom_call.1} parent=23 // pred_fallthru
          _
        // Predicated region
        $region33: #{tpu_custom_call.1} parent=23 // pred_check
          %p162 = pneg %p153
        $region34: #{tpu_custom_call.1} parent=23 // pred_check_branch
          %164 = sbr.rel (%p162) target = $region36
        $region35: #{tpu_custom_call.1} parent=23 // pred_region
          %vm165 = vcmask 7168
          %166 = vst.msk [vmem:[#allocation3] sm:$0xff] %vm165, 0.0
          %167 = vst.msk [vmem:[#allocation3 + $0x8] sm:$0xff] %vm165, 0.0
          %168 = vst.msk [vmem:[#allocation3 + $0x10] sm:$0xff] %vm165, 0.0
          %169 = vst.msk [vmem:[#allocation3 + $0x18] sm:$0xff] %vm165, 0.0
          %170 = vst.msk [vmem:[#allocation3 + $0x20] sm:$0xff] %vm165, 0.0
          %171 = vst.msk [vmem:[#allocation3 + $0x28] sm:$0xff] %vm165, 0.0
          %172 = vst.msk [vmem:[#allocation3 + $0x30] sm:$0xff] %vm165, 0.0
          %173 = vst.msk [vmem:[#allocation3 + $0x38] sm:$0xff] %vm165, 0.0
          %174 = vst.msk [vmem:[#allocation3 + $0x40] sm:$0xff] %vm165, 0.0
          %175 = vst.msk [vmem:[#allocation3 + $0x48] sm:$0xff] %vm165, 0.0
          %176 = vst.msk [vmem:[#allocation3 + $0x50] sm:$0xff] %vm165, 0.0
          %177 = vst.msk [vmem:[#allocation3 + $0x58] sm:$0xff] %vm165, 0.0
          %178 = vst.msk [vmem:[#allocation3 + $0x60] sm:$0xff] %vm165, 0.0
          %179 = vst.msk [vmem:[#allocation3 + $0x68] sm:$0xff] %vm165, 0.0
          %180 = vst.msk [vmem:[#allocation3 + $0x70] sm:$0xff] %vm165, 0.0
          %181 = vst.msk [vmem:[#allocation3 + $0x78] sm:$0xff] %vm165, 0.0
        $region36: #{tpu_custom_call.1} parent=23 // pred_fallthru
          _
        %v182 = vld [vmem:[%s131] sm:$0xff]
        %v183 = vld [vmem:[%s131 + $0x8] sm:$0xff]
        %v184 = vld [vmem:[%s131 + $0x10] sm:$0xff]
        %v185 = vld [vmem:[%s131 + $0x18] sm:$0xff]
        %v186 = vld [vmem:[%s131 + $0x20] sm:$0xff]
        %v187 = vld [vmem:[%s131 + $0x28] sm:$0xff]
        %v188 = vld [vmem:[%s131 + $0x30] sm:$0xff]
        %v189 = vld [vmem:[%s131 + $0x38] sm:$0xff]
        %v190 = vld [vmem:[%s131 + $0x40] sm:$0xff]
        %v191 = vld [vmem:[%s131 + $0x48] sm:$0xff]
        %v192 = vld [vmem:[%s131 + $0x50] sm:$0xff]
        %v193 = vld [vmem:[%s131 + $0x58] sm:$0xff]
        %v194 = vld [vmem:[%s131 + $0x60] sm:$0xff]
        %v195 = vld [vmem:[%s131 + $0x68] sm:$0xff]
        %v196 = vld [vmem:[%s131 + $0x70] sm:$0xff]
        %v197 = vld [vmem:[%s131 + $0x78] sm:$0xff]
        %v198 = vmul.f32 %v182, 20.0
        %v199 = vmul.f32 %v183, 20.0
        %v200 = vmul.f32 %v184, 20.0
        %v201 = vmul.f32 %v185, 20.0
        %v202 = vmul.f32 %v186, 20.0
        %v203 = vmul.f32 %v187, 20.0
        %v204 = vmul.f32 %v188, 20.0
        %v205 = vmul.f32 %v189, 20.0
        %v206 = vmul.f32 %v190, 20.0
        %v207 = vmul.f32 %v191, 20.0
        %v208 = vmul.f32 %v192, 20.0
        %v209 = vmul.f32 %v193, 20.0
        %v210 = vmul.f32 %v194, 20.0
        %v211 = vmul.f32 %v195, 20.0
        %v212 = vmul.f32 %v196, 20.0
        %v213 = vmul.f32 %v197, 20.0
        %v214 = vsub.f32 %v198, 20.0
        %v215 = vsub.f32 %v199, 20.0
        %v216 = vsub.f32 %v200, 20.0
        %v217 = vsub.f32 %v201, 20.0
        %v218 = vsub.f32 %v202, 20.0
        %v219 = vsub.f32 %v203, 20.0
        %v220 = vsub.f32 %v204, 20.0
        %v221 = vsub.f32 %v205, 20.0
        %v222 = vsub.f32 %v206, 20.0
        %v223 = vsub.f32 %v207, 20.0
        %v224 = vsub.f32 %v208, 20.0
        %v225 = vsub.f32 %v209, 20.0
        %v226 = vsub.f32 %v210, 20.0
        %v227 = vsub.f32 %v211, 20.0
        %v228 = vsub.f32 %v212, 20.0
        %v229 = vsub.f32 %v213, 20.0
        %v230 = vmul.f32 %v214, 1.442695
        %v231 = vpow.pop %v230
        %v232 = vmul.f32 %v215, 1.442695
        %v233 = vpow.pop %v232
        %v234 = vmul.f32 %v216, 1.442695
        %v235 = vpow.pop %v234
        %v236 = vmul.f32 %v217, 1.442695
        %v237 = vpow.pop %v236
        %v238 = vmul.f32 %v218, 1.442695
        %v239 = vpow.pop %v238
        %v240 = vmul.f32 %v219, 1.442695
        %v241 = vpow.pop %v240
        %v242 = vmul.f32 %v220, 1.442695
        %v243 = vpow.pop %v242
        %v244 = vmul.f32 %v221, 1.442695
        %v245 = vpow.pop %v244
        %v246 = vmul.f32 %v222, 1.442695
        %v247 = vpow.pop %v246
        %v248 = vmul.f32 %v223, 1.442695
        %v249 = vpow.pop %v248
        %v250 = vmul.f32 %v224, 1.442695
        %v251 = vpow.pop %v250
        %v252 = vmul.f32 %v225, 1.442695
        %v253 = vpow.pop %v252
        %v254 = vmul.f32 %v226, 1.442695
        %v255 = vpow.pop %v254
        %v256 = vmul.f32 %v227, 1.442695
        %v257 = vpow.pop %v256
        %v258 = vmul.f32 %v228, 1.442695
        %v259 = vpow.pop %v258
        %v260 = vmul.f32 %v229, 1.442695
        %v261 = vpow.pop %v260
        %v262 = vlaneseq
        %v263 = vshrl.u32 %v262, 7
        %v264 = vadd.s32 %v263, 8
        %v265 = vadd.s32 %v263, 16
        %v266 = vadd.s32 %v263, 24
        %v267 = vadd.s32 %v263, 32
        %v268 = vadd.s32 %v263, 40
        %v269 = vadd.s32 %v263, 48
        %v270 = vadd.s32 %v263, 56
        %v271 = vadd.s32 %v263, 64
        %v272 = vadd.s32 %v263, 72
        %v273 = vadd.s32 %v263, 80
        %v274 = vadd.s32 %v263, 88
        %v275 = vadd.s32 %v263, 96
        %v276 = vadd.s32 %v263, 104
        %v277 = vadd.s32 %v263, 112
        %v278 = vadd.s32 %v263, 120
        %v279 = vstv %s150
        %v280 = vadd.s32 %v279, %v263
        %v281 = vadd.s32 %v279, %v264
        %v282 = vadd.s32 %v279, %v265
        %v283 = vadd.s32 %v279, %v266
        %v284 = vadd.s32 %v279, %v267
        %v285 = vadd.s32 %v279, %v268
        %v286 = vadd.s32 %v279, %v269
        %v287 = vadd.s32 %v279, %v270
        %v288 = vadd.s32 %v279, %v271
        %v289 = vadd.s32 %v279, %v272
        %v290 = vadd.s32 %v279, %v273
        %v291 = vadd.s32 %v279, %v274
        %v292 = vadd.s32 %v279, %v275
        %v293 = vadd.s32 %v279, %v276
        %v294 = vadd.s32 %v279, %v277
        %v295 = vadd.s32 %v279, %v278
        %vm296 = vcmp.lt.s32.totalorder %v280, 200
        %vm297 = vcmp.lt.s32.totalorder %v281, 200
        %vm298 = vcmp.lt.s32.totalorder %v282, 200
        %vm299 = vcmp.lt.s32.totalorder %v283, 200
        %vm300 = vcmp.lt.s32.totalorder %v284, 200
        %vm301 = vcmp.lt.s32.totalorder %v285, 200
        %vm302 = vcmp.lt.s32.totalorder %v286, 200
        %vm303 = vcmp.lt.s32.totalorder %v287, 200
        %vm304 = vcmp.lt.s32.totalorder %v288, 200
        %vm305 = vcmp.lt.s32.totalorder %v289, 200
        %vm306 = vcmp.lt.s32.totalorder %v290, 200
        %vm307 = vcmp.lt.s32.totalorder %v291, 200
        %vm308 = vcmp.lt.s32.totalorder %v292, 200
        %vm309 = vcmp.lt.s32.totalorder %v293, 200
        %vm310 = vcmp.lt.s32.totalorder %v294, 200
        %vm311 = vcmp.lt.s32.totalorder %v295, 200
        %v312 = vlaneseq
        %v313 = vand.u32 %v312, 127
        %v314 = vstv %s151
        %v315 = vadd.s32 %v314, %v313
        %vm316 = vcmp.lt.s32.totalorder %v315, 200
        %v317 = vsel %vm296, 1, 0
        %v318 = vsel %vm297, 1, 0
        %v319 = vsel %vm298, 1, 0
        %v320 = vsel %vm299, 1, 0
        %v321 = vsel %vm300, 1, 0
        %v322 = vsel %vm301, 1, 0
        %v323 = vsel %vm302, 1, 0
        %v324 = vsel %vm303, 1, 0
        %v325 = vsel %vm304, 1, 0
        %v326 = vsel %vm305, 1, 0
        %v327 = vsel %vm306, 1, 0
        %v328 = vsel %vm307, 1, 0
        %v329 = vsel %vm308, 1, 0
        %v330 = vsel %vm309, 1, 0
        %v331 = vsel %vm310, 1, 0
        %v332 = vsel %vm311, 1, 0
        %vm333 = vcmp.eq.s32.totalorder %v317, 1
        %vm334 = vcmp.eq.s32.totalorder %v318, 1
        %vm335 = vcmp.eq.s32.totalorder %v319, 1
        %vm336 = vcmp.eq.s32.totalorder %v320, 1
        %vm337 = vcmp.eq.s32.totalorder %v321, 1
        %vm338 = vcmp.eq.s32.totalorder %v322, 1
        %vm339 = vcmp.eq.s32.totalorder %v323, 1
        %vm340 = vcmp.eq.s32.totalorder %v324, 1
        %vm341 = vcmp.eq.s32.totalorder %v325, 1
        %vm342 = vcmp.eq.s32.totalorder %v326, 1
        %vm343 = vcmp.eq.s32.totalorder %v327, 1
        %vm344 = vcmp.eq.s32.totalorder %v328, 1
        %vm345 = vcmp.eq.s32.totalorder %v329, 1
        %vm346 = vcmp.eq.s32.totalorder %v330, 1
        %vm347 = vcmp.eq.s32.totalorder %v331, 1
        %vm348 = vcmp.eq.s32.totalorder %v332, 1
        %v349 = vsel %vm316, 1, 0
        %vm350 = vcmp.eq.s32.totalorder %v349, 1
        %vm351 = vmand %vm333, %vm350
        %vm352 = vmand %vm334, %vm350
        %vm353 = vmand %vm335, %vm350
        %vm354 = vmand %vm336, %vm350
        %vm355 = vmand %vm337, %vm350
        %vm356 = vmand %vm338, %vm350
        %vm357 = vmand %vm339, %vm350
        %vm358 = vmand %vm340, %vm350
        %vm359 = vmand %vm341, %vm350
        %vm360 = vmand %vm342, %vm350
        %vm361 = vmand %vm343, %vm350
        %vm362 = vmand %vm344, %vm350
        %vm363 = vmand %vm345, %vm350
        %vm364 = vmand %vm346, %vm350
        %vm365 = vmand %vm347, %vm350
        %vm366 = vmand %vm348, %vm350
        %v367 = vsel %vm351, %v231, 0.0
        %v368 = vsel %vm352, %v233, 0.0
        %v369 = vsel %vm353, %v235, 0.0
        %v370 = vsel %vm354, %v237, 0.0
        %v371 = vsel %vm355, %v239, 0.0
        %v372 = vsel %vm356, %v241, 0.0
        %v373 = vsel %vm357, %v243, 0.0
        %v374 = vsel %vm358, %v245, 0.0
        %v375 = vsel %vm359, %v247, 0.0
        %v376 = vsel %vm360, %v249, 0.0
        %v377 = vsel %vm361, %v251, 0.0
        %v378 = vsel %vm362, %v253, 0.0
        %v379 = vsel %vm363, %v255, 0.0
        %v380 = vsel %vm364, %v257, 0.0
        %v381 = vsel %vm365, %v259, 0.0
        %v382 = vsel %vm366, %v261, 0.0
        %v383 = vld [vmem:[#allocation3] sm:$0xff]
        %v384 = vld [vmem:[#allocation3 + $0x8] sm:$0xff]
        %v385 = vld [vmem:[#allocation3 + $0x10] sm:$0xff]
        %v386 = vld [vmem:[#allocation3 + $0x18] sm:$0xff]
        %v387 = vld [vmem:[#allocation3 + $0x20] sm:$0xff]
        %v388 = vld [vmem:[#allocation3 + $0x28] sm:$0xff]
        %v389 = vld [vmem:[#allocation3 + $0x30] sm:$0xff]
        %v390 = vld [vmem:[#allocation3 + $0x38] sm:$0xff]
        %v391 = vld [vmem:[#allocation3 + $0x40] sm:$0xff]
        %v392 = vld [vmem:[#allocation3 + $0x48] sm:$0xff]
        %v393 = vld [vmem:[#allocation3 + $0x50] sm:$0xff]
        %v394 = vld [vmem:[#allocation3 + $0x58] sm:$0xff]
        %v395 = vld [vmem:[#allocation3 + $0x60] sm:$0xff]
        %v396 = vld [vmem:[#allocation3 + $0x68] sm:$0xff]
        %v397 = vld [vmem:[#allocation3 + $0x70] sm:$0xff]
        %v398 = vld [vmem:[#allocation3 + $0x78] sm:$0xff]
        %399 = vadd.xlane.f32.xlu0 %v367
        %v400 = vpop.xlane.xlu0 %399
        %401 = vadd.xlane.f32.xlu0 %v368
        %v402 = vpop.xlane.xlu0 %401
        %403 = vadd.xlane.f32.xlu0 %v369
        %v404 = vpop.xlane.xlu0 %403
        %405 = vadd.xlane.f32.xlu0 %v370
        %v406 = vpop.xlane.xlu0 %405
        %407 = vadd.xlane.f32.xlu0 %v371
        %v408 = vpop.xlane.xlu0 %407
        %409 = vadd.xlane.f32.xlu0 %v372
        %v410 = vpop.xlane.xlu0 %409
        %411 = vadd.xlane.f32.xlu0 %v373
        %v412 = vpop.xlane.xlu0 %411
        %413 = vadd.xlane.f32.xlu0 %v374
        %v414 = vpop.xlane.xlu0 %413
        %415 = vadd.xlane.f32.xlu0 %v375
        %v416 = vpop.xlane.xlu0 %415
        %417 = vadd.xlane.f32.xlu0 %v376
        %v418 = vpop.xlane.xlu0 %417
        %419 = vadd.xlane.f32.xlu0 %v377
        %v420 = vpop.xlane.xlu0 %419
        %421 = vadd.xlane.f32.xlu0 %v378
        %v422 = vpop.xlane.xlu0 %421
        %423 = vadd.xlane.f32.xlu0 %v379
        %v424 = vpop.xlane.xlu0 %423
        %425 = vadd.xlane.f32.xlu0 %v380
        %v426 = vpop.xlane.xlu0 %425
        %427 = vadd.xlane.f32.xlu0 %v381
        %v428 = vpop.xlane.xlu0 %427
        %429 = vadd.xlane.f32.xlu0 %v382
        %v430 = vpop.xlane.xlu0 %429
        %v431 = vadd.f32 %v383, %v400
        %v432 = vadd.f32 %v384, %v402
        %v433 = vadd.f32 %v385, %v404
        %v434 = vadd.f32 %v386, %v406
        %v435 = vadd.f32 %v387, %v408
        %v436 = vadd.f32 %v388, %v410
        %v437 = vadd.f32 %v389, %v412
        %v438 = vadd.f32 %v390, %v414
        %v439 = vadd.f32 %v391, %v416
        %v440 = vadd.f32 %v392, %v418
        %v441 = vadd.f32 %v393, %v420
        %v442 = vadd.f32 %v394, %v422
        %v443 = vadd.f32 %v395, %v424
        %v444 = vadd.f32 %v396, %v426
        %v445 = vadd.f32 %v397, %v428
        %v446 = vadd.f32 %v398, %v430
        %vm447 = vcmask 7168
        %448 = vst.msk [vmem:[#allocation3] sm:$0xff] %vm447, %v431
        %449 = vst.msk [vmem:[#allocation3 + $0x8] sm:$0xff] %vm447, %v432
        %450 = vst.msk [vmem:[#allocation3 + $0x10] sm:$0xff] %vm447, %v433
        %451 = vst.msk [vmem:[#allocation3 + $0x18] sm:$0xff] %vm447, %v434
        %452 = vst.msk [vmem:[#allocation3 + $0x20] sm:$0xff] %vm447, %v435
        %453 = vst.msk [vmem:[#allocation3 + $0x28] sm:$0xff] %vm447, %v436
        %454 = vst.msk [vmem:[#allocation3 + $0x30] sm:$0xff] %vm447, %v437
        %455 = vst.msk [vmem:[#allocation3 + $0x38] sm:$0xff] %vm447, %v438
        %456 = vst.msk [vmem:[#allocation3 + $0x40] sm:$0xff] %vm447, %v439
        %457 = vst.msk [vmem:[#allocation3 + $0x48] sm:$0xff] %vm447, %v440
        %458 = vst.msk [vmem:[#allocation3 + $0x50] sm:$0xff] %vm447, %v441
        %459 = vst.msk [vmem:[#allocation3 + $0x58] sm:$0xff] %vm447, %v442
        %460 = vst.msk [vmem:[#allocation3 + $0x60] sm:$0xff] %vm447, %v443
        %461 = vst.msk [vmem:[#allocation3 + $0x68] sm:$0xff] %vm447, %v444
        %462 = vst.msk [vmem:[#allocation3 + $0x70] sm:$0xff] %vm447, %v445
        %463 = vst.msk [vmem:[#allocation3 + $0x78] sm:$0xff] %vm447, %v446
        %464 = vmatprep.subr.mxu0 0.0
        %v465 = vand.u32 %v382, 4294901760
        %466 = vmatpush1.msra.mxu0 %v465
        %467 = vmatprep.subr.mxu0 0.0
        %v468 = vand.u32 %v381, 4294901760
        %469 = vmatpush1.msra.mxu0 %v468
        %470 = vmatprep.subr.mxu0 0.0
        %v471 = vand.u32 %v380, 4294901760
        %472 = vmatpush1.msra.mxu0 %v471
        %473 = vmatprep.subr.mxu0 0.0
        %v474 = vand.u32 %v379, 4294901760
        %475 = vmatpush1.msra.mxu0 %v474
        %476 = vmatprep.subr.mxu0 0.0
        %v477 = vand.u32 %v378, 4294901760
        %478 = vmatpush1.msra.mxu0 %v477
        %479 = vmatprep.subr.mxu0 0.0
        %v480 = vand.u32 %v377, 4294901760
        %481 = vmatpush1.msra.mxu0 %v480
        %482 = vmatprep.subr.mxu0 0.0
        %v483 = vand.u32 %v376, 4294901760
        %484 = vmatpush1.msra.mxu0 %v483
        %485 = vmatprep.subr.mxu0 0.0
        %v486 = vand.u32 %v375, 4294901760
        %487 = vmatpush1.msra.mxu0 %v486
        %488 = vmatprep.subr.mxu0 0.0
        %v489 = vand.u32 %v374, 4294901760
        %490 = vmatpush1.msra.mxu0 %v489
        %491 = vmatprep.subr.mxu0 0.0
        %v492 = vand.u32 %v373, 4294901760
        %493 = vmatpush1.msra.mxu0 %v492
        %494 = vmatprep.subr.mxu0 0.0
        %v495 = vand.u32 %v372, 4294901760
        %496 = vmatpush1.msra.mxu0 %v495
        %497 = vmatprep.subr.mxu0 0.0
        %v498 = vand.u32 %v371, 4294901760
        %499 = vmatpush1.msra.mxu0 %v498
        %500 = vmatprep.subr.mxu0 0.0
        %v501 = vand.u32 %v370, 4294901760
        %502 = vmatpush1.msra.mxu0 %v501
        %503 = vmatprep.subr.mxu0 0.0
        %v504 = vand.u32 %v369, 4294901760
        %505 = vmatpush1.msra.mxu0 %v504
        %506 = vmatprep.subr.mxu0 0.0
        %v507 = vand.u32 %v368, 4294901760
        %508 = vmatpush1.msra.mxu0 %v507
        %509 = vmatprep.subr.mxu0 0.0
        %v510 = vand.u32 %v367, 4294901760
        %511 = vmatpush1.msra.mxu0 %v510
        %512 = vmatprep.subr.mxu0 0.0
        %513 = vmatpush2.msra.mxu0 0.0
        %514 = vmatprep.subr.mxu0 0.0
        %515 = vmatpush2.msra.mxu0 0.0
        %516 = vmatprep.subr.mxu0 0.0
        %517 = vmatpush2.msra.mxu0 0.0
        %518 = vmatprep.subr.mxu0 0.0
        %519 = vmatpush2.msra.mxu0 0.0
        %520 = vmatprep.subr.mxu0 0.0
        %521 = vmatpush2.msra.mxu0 0.0
        %522 = vmatprep.subr.mxu0 0.0
        %523 = vmatpush2.msra.mxu0 0.0
        %524 = vmatprep.subr.mxu0 0.0
        %525 = vmatpush2.msra.mxu0 0.0
        %526 = vmatprep.subr.mxu0 0.0
        %527 = vmatpush2.msra.mxu0 0.0
        %528 = vmatprep.subr.mxu0 0.0
        %529 = vmatpush2.msra.mxu0 0.0
        %530 = vmatprep.subr.mxu0 0.0
        %531 = vmatpush2.msra.mxu0 0.0
        %532 = vmatprep.subr.mxu0 0.0
        %533 = vmatpush2.msra.mxu0 0.0
        %534 = vmatprep.subr.mxu0 0.0
        %535 = vmatpush2.msra.mxu0 0.0
        %536 = vmatprep.subr.mxu0 0.0
        %537 = vmatpush2.msra.mxu0 0.0
        %538 = vmatprep.subr.mxu0 0.0
        %539 = vmatpush2.msra.mxu0 0.0
        %540 = vmatprep.subr.mxu0 0.0
        %541 = vmatpush2.msra.mxu0 0.0
        %542 = vmatprep.subr.mxu0 0.0
        %543 = vmatpush2.msra.mxu0 0.0
        %544 = vmatprep.mubr.f32.mxu0 0.0
        %545 = vmatmul.mubr.f32.gmra.mxu0 0.0
        %v546 = vpop.f32.mrf.mxu0
        %v547 = vadd.f32 0.0, %v546
        %v548 = vpop.f32.mrf.mxu0
        %549 = vdwg.mxu0
        %550 = vmatprep.subr.mxu0 0.0
        %v551 = vand.u32 %v382, 4294901760
        %v552 = vsub.f32 %v382, %v551
        %v553 = vand.u32 %v552, 4294901760
        %v554 = vsub.f32 %v552, %v553
        %v555 = vand.u32 %v554, 4294901760
        %556 = vmatpush1.msra.mxu0 %v555
        %557 = vmatprep.subr.mxu0 0.0
        %v558 = vand.u32 %v381, 4294901760
        %v559 = vsub.f32 %v381, %v558
        %v560 = vand.u32 %v559, 4294901760
        %v561 = vsub.f32 %v559, %v560
        %v562 = vand.u32 %v561, 4294901760
        %563 = vmatpush1.msra.mxu0 %v562
        %564 = vmatprep.subr.mxu0 0.0
        %v565 = vand.u32 %v380, 4294901760
        %v566 = vsub.f32 %v380, %v565
        %v567 = vand.u32 %v566, 4294901760
        %v568 = vsub.f32 %v566, %v567
        %v569 = vand.u32 %v568, 4294901760
        %570 = vmatpush1.msra.mxu0 %v569
        %571 = vmatprep.subr.mxu0 0.0
        %v572 = vand.u32 %v379, 4294901760
        %v573 = vsub.f32 %v379, %v572
        %v574 = vand.u32 %v573, 4294901760
        %v575 = vsub.f32 %v573, %v574
        %v576 = vand.u32 %v575, 4294901760
        %577 = vmatpush1.msra.mxu0 %v576
        %578 = vmatprep.subr.mxu0 0.0
        %v579 = vand.u32 %v378, 4294901760
        %v580 = vsub.f32 %v378, %v579
        %v581 = vand.u32 %v580, 4294901760
        %v582 = vsub.f32 %v580, %v581
        %v583 = vand.u32 %v582, 4294901760
        %584 = vmatpush1.msra.mxu0 %v583
        %585 = vmatprep.subr.mxu0 0.0
        %v586 = vand.u32 %v377, 4294901760
        %v587 = vsub.f32 %v377, %v586
        %v588 = vand.u32 %v587, 4294901760
        %v589 = vsub.f32 %v587, %v588
        %v590 = vand.u32 %v589, 4294901760
        %591 = vmatpush1.msra.mxu0 %v590
        %592 = vmatprep.subr.mxu0 0.0
        %v593 = vand.u32 %v376, 4294901760
        %v594 = vsub.f32 %v376, %v593
        %v595 = vand.u32 %v594, 4294901760
        %v596 = vsub.f32 %v594, %v595
        %v597 = vand.u32 %v596, 4294901760
        %598 = vmatpush1.msra.mxu0 %v597
        %599 = vmatprep.subr.mxu0 0.0
        %v600 = vand.u32 %v375, 4294901760
        %v601 = vsub.f32 %v375, %v600
        %v602 = vand.u32 %v601, 4294901760
        %v603 = vsub.f32 %v601, %v602
        %v604 = vand.u32 %v603, 4294901760
        %605 = vmatpush1.msra.mxu0 %v604
        %606 = vmatprep.subr.mxu0 0.0
        %v607 = vand.u32 %v374, 4294901760
        %v608 = vsub.f32 %v374, %v607
        %v609 = vand.u32 %v608, 4294901760
        %v610 = vsub.f32 %v608, %v609
        %v611 = vand.u32 %v610, 4294901760
        %612 = vmatpush1.msra.mxu0 %v611
        %613 = vmatprep.subr.mxu0 0.0
        %v614 = vand.u32 %v373, 4294901760
        %v615 = vsub.f32 %v373, %v614
        %v616 = vand.u32 %v615, 4294901760
        %v617 = vsub.f32 %v615, %v616
        %v618 = vand.u32 %v617, 4294901760
        %619 = vmatpush1.msra.mxu0 %v618
        %620 = vmatprep.subr.mxu0 0.0
        %v621 = vand.u32 %v372, 4294901760
        %v622 = vsub.f32 %v372, %v621
        %v623 = vand.u32 %v622, 4294901760
        %v624 = vsub.f32 %v622, %v623
        %v625 = vand.u32 %v624, 4294901760
        %626 = vmatpush1.msra.mxu0 %v625
        %627 = vmatprep.subr.mxu0 0.0
        %v628 = vand.u32 %v371, 4294901760
        %v629 = vsub.f32 %v371, %v628
        %v630 = vand.u32 %v629, 4294901760
        %v631 = vsub.f32 %v629, %v630
        %v632 = vand.u32 %v631, 4294901760
        %633 = vmatpush1.msra.mxu0 %v632
        %634 = vmatprep.subr.mxu0 0.0
        %v635 = vand.u32 %v370, 4294901760
        %v636 = vsub.f32 %v370, %v635
        %v637 = vand.u32 %v636, 4294901760
        %v638 = vsub.f32 %v636, %v637
        %v639 = vand.u32 %v638, 4294901760
        %640 = vmatpush1.msra.mxu0 %v639
        %641 = vmatprep.subr.mxu0 0.0
        %v642 = vand.u32 %v369, 4294901760
        %v643 = vsub.f32 %v369, %v642
        %v644 = vand.u32 %v643, 4294901760
        %v645 = vsub.f32 %v643, %v644
        %v646 = vand.u32 %v645, 4294901760
        %647 = vmatpush1.msra.mxu0 %v646
        %648 = vmatprep.subr.mxu0 0.0
        %v649 = vand.u32 %v368, 4294901760
        %v650 = vsub.f32 %v368, %v649
        %v651 = vand.u32 %v650, 4294901760
        %v652 = vsub.f32 %v650, %v651
        %v653 = vand.u32 %v652, 4294901760
        %654 = vmatpush1.msra.mxu0 %v653
        %655 = vmatprep.subr.mxu0 0.0
        %v656 = vand.u32 %v367, 4294901760
        %v657 = vsub.f32 %v367, %v656
        %v658 = vand.u32 %v657, 4294901760
        %v659 = vsub.f32 %v657, %v658
        %v660 = vand.u32 %v659, 4294901760
        %661 = vmatpush1.msra.mxu0 %v660
        %662 = vmatprep.subr.mxu0 0.0
        %663 = vmatpush2.msra.mxu0 0.0
        %664 = vmatprep.subr.mxu0 0.0
        %665 = vmatpush2.msra.mxu0 0.0
        %666 = vmatprep.subr.mxu0 0.0
        %667 = vmatpush2.msra.mxu0 0.0
        %668 = vmatprep.subr.mxu0 0.0
        %669 = vmatpush2.msra.mxu0 0.0
        %670 = vmatprep.subr.mxu0 0.0
        %671 = vmatpush2.msra.mxu0 0.0
        %672 = vmatprep.subr.mxu0 0.0
        %673 = vmatpush2.msra.mxu0 0.0
        %674 = vmatprep.subr.mxu0 0.0
        %675 = vmatpush2.msra.mxu0 0.0
        %676 = vmatprep.subr.mxu0 0.0
        %677 = vmatpush2.msra.mxu0 0.0
        %678 = vmatprep.subr.mxu0 0.0
        %679 = vmatpush2.msra.mxu0 0.0
        %680 = vmatprep.subr.mxu0 0.0
        %681 = vmatpush2.msra.mxu0 0.0
        %682 = vmatprep.subr.mxu0 0.0
        %683 = vmatpush2.msra.mxu0 0.0
        %684 = vmatprep.subr.mxu0 0.0
        %685 = vmatpush2.msra.mxu0 0.0
        %686 = vmatprep.subr.mxu0 0.0
        %687 = vmatpush2.msra.mxu0 0.0
        %688 = vmatprep.subr.mxu0 0.0
        %689 = vmatpush2.msra.mxu0 0.0
        %690 = vmatprep.subr.mxu0 0.0
        %691 = vmatpush2.msra.mxu0 0.0
        %692 = vmatprep.subr.mxu0 0.0
        %693 = vmatpush2.msra.mxu0 0.0
        %694 = vmatprep.mubr.f32.mxu0 0.0
        %695 = vmatmul.mubr.f32.gmra.mxu0 1.0
        %v696 = vpop.f32.mrf.mxu0
        %v697 = vadd.f32 %v547, %v696
        %v698 = vpop.f32.mrf.mxu0
        %699 = vdwg.mxu0
        %700 = vmatprep.subr.mxu0 0.0
        %v701 = vand.u32 %v382, 4294901760
        %v702 = vsub.f32 %v382, %v701
        %703 = vmatpush1.msra.mxu0 %v702
        %704 = vmatprep.subr.mxu0 0.0
        %v705 = vand.u32 %v381, 4294901760
        %v706 = vsub.f32 %v381, %v705
        %707 = vmatpush1.msra.mxu0 %v706
        %708 = vmatprep.subr.mxu0 0.0
        %v709 = vand.u32 %v380, 4294901760
        %v710 = vsub.f32 %v380, %v709
        %711 = vmatpush1.msra.mxu0 %v710
        %712 = vmatprep.subr.mxu0 0.0
        %v713 = vand.u32 %v379, 4294901760
        %v714 = vsub.f32 %v379, %v713
        %715 = vmatpush1.msra.mxu0 %v714
        %716 = vmatprep.subr.mxu0 0.0
        %v717 = vand.u32 %v378, 4294901760
        %v718 = vsub.f32 %v378, %v717
        %719 = vmatpush1.msra.mxu0 %v718
        %720 = vmatprep.subr.mxu0 0.0
        %v721 = vand.u32 %v377, 4294901760
        %v722 = vsub.f32 %v377, %v721
        %723 = vmatpush1.msra.mxu0 %v722
        %724 = vmatprep.subr.mxu0 0.0
        %v725 = vand.u32 %v376, 4294901760
        %v726 = vsub.f32 %v376, %v725
        %727 = vmatpush1.msra.mxu0 %v726
        %728 = vmatprep.subr.mxu0 0.0
        %v729 = vand.u32 %v375, 4294901760
        %v730 = vsub.f32 %v375, %v729
        %731 = vmatpush1.msra.mxu0 %v730
        %732 = vmatprep.subr.mxu0 0.0
        %v733 = vand.u32 %v374, 4294901760
        %v734 = vsub.f32 %v374, %v733
        %735 = vmatpush1.msra.mxu0 %v734
        %736 = vmatprep.subr.mxu0 0.0
        %v737 = vand.u32 %v373, 4294901760
        %v738 = vsub.f32 %v373, %v737
        %739 = vmatpush1.msra.mxu0 %v738
        %740 = vmatprep.subr.mxu0 0.0
        %v741 = vand.u32 %v372, 4294901760
        %v742 = vsub.f32 %v372, %v741
        %743 = vmatpush1.msra.mxu0 %v742
        %744 = vmatprep.subr.mxu0 0.0
        %v745 = vand.u32 %v371, 4294901760
        %v746 = vsub.f32 %v371, %v745
        %747 = vmatpush1.msra.mxu0 %v746
        %748 = vmatprep.subr.mxu0 0.0
        %v749 = vand.u32 %v370, 4294901760
        %v750 = vsub.f32 %v370, %v749
        %751 = vmatpush1.msra.mxu0 %v750
        %752 = vmatprep.subr.mxu0 0.0
        %v753 = vand.u32 %v369, 4294901760
        %v754 = vsub.f32 %v369, %v753
        %755 = vmatpush1.msra.mxu0 %v754
        %756 = vmatprep.subr.mxu0 0.0
        %v757 = vand.u32 %v368, 4294901760
        %v758 = vsub.f32 %v368, %v757
        %759 = vmatpush1.msra.mxu0 %v758
        %760 = vmatprep.subr.mxu0 0.0
        %v761 = vand.u32 %v367, 4294901760
        %v762 = vsub.f32 %v367, %v761
        %763 = vmatpush1.msra.mxu0 %v762
        %764 = vmatprep.subr.mxu0 0.0
        %765 = vmatpush2.msra.mxu0 0.0
        %766 = vmatprep.subr.mxu0 0.0
        %767 = vmatpush2.msra.mxu0 0.0
        %768 = vmatprep.subr.mxu0 0.0
        %769 = vmatpush2.msra.mxu0 0.0
        %770 = vmatprep.subr.mxu0 0.0
        %771 = vmatpush2.msra.mxu0 0.0
        %772 = vmatprep.subr.mxu0 0.0
        %773 = vmatpush2.msra.mxu0 0.0
        %774 = vmatprep.subr.mxu0 0.0
        %775 = vmatpush2.msra.mxu0 0.0
        %776 = vmatprep.subr.mxu0 0.0
        %777 = vmatpush2.msra.mxu0 0.0
        %778 = vmatprep.subr.mxu0 0.0
        %779 = vmatpush2.msra.mxu0 0.0
        %780 = vmatprep.subr.mxu0 0.0
        %781 = vmatpush2.msra.mxu0 0.0
        %782 = vmatprep.subr.mxu0 0.0
        %783 = vmatpush2.msra.mxu0 0.0
        %784 = vmatprep.subr.mxu0 0.0
        %785 = vmatpush2.msra.mxu0 0.0
        %786 = vmatprep.subr.mxu0 0.0
        %787 = vmatpush2.msra.mxu0 0.0
        %788 = vmatprep.subr.mxu0 0.0
        %789 = vmatpush2.msra.mxu0 0.0
        %790 = vmatprep.subr.mxu0 0.0
        %791 = vmatpush2.msra.mxu0 0.0
        %792 = vmatprep.subr.mxu0 0.0
        %793 = vmatpush2.msra.mxu0 0.0
        %794 = vmatprep.subr.mxu0 0.0
        %795 = vmatpush2.msra.mxu0 0.0
        %796 = vmatprep.mubr.f32.mxu0 0.0
        %797 = vmatmul.mubr.f32.gmra.mxu0 0.0
        %v798 = vpop.f32.mrf.mxu0
        %v799 = vadd.f32 %v697, %v798
        %v800 = vpop.f32.mrf.mxu0
        %801 = vdwg.mxu0
        %802 = vmatprep.subr.mxu0 0.0
        %v803 = vand.u32 %v382, 4294901760
        %804 = vmatpush1.msra.mxu0 %v803
        %805 = vmatprep.subr.mxu0 0.0
        %v806 = vand.u32 %v381, 4294901760
        %807 = vmatpush1.msra.mxu0 %v806
        %808 = vmatprep.subr.mxu0 0.0
        %v809 = vand.u32 %v380, 4294901760
        %810 = vmatpush1.msra.mxu0 %v809
        %811 = vmatprep.subr.mxu0 0.0
        %v812 = vand.u32 %v379, 4294901760
        %813 = vmatpush1.msra.mxu0 %v812
        %814 = vmatprep.subr.mxu0 0.0
        %v815 = vand.u32 %v378, 4294901760
        %816 = vmatpush1.msra.mxu0 %v815
        %817 = vmatprep.subr.mxu0 0.0
        %v818 = vand.u32 %v377, 4294901760
        %819 = vmatpush1.msra.mxu0 %v818
        %820 = vmatprep.subr.mxu0 0.0
        %v821 = vand.u32 %v376, 4294901760
        %822 = vmatpush1.msra.mxu0 %v821
        %823 = vmatprep.subr.mxu0 0.0
        %v824 = vand.u32 %v375, 4294901760
        %825 = vmatpush1.msra.mxu0 %v824
        %826 = vmatprep.subr.mxu0 0.0
        %v827 = vand.u32 %v374, 4294901760
        %828 = vmatpush1.msra.mxu0 %v827
        %829 = vmatprep.subr.mxu0 0.0
        %v830 = vand.u32 %v373, 4294901760
        %831 = vmatpush1.msra.mxu0 %v830
        %832 = vmatprep.subr.mxu0 0.0
        %v833 = vand.u32 %v372, 4294901760
        %834 = vmatpush1.msra.mxu0 %v833
        %835 = vmatprep.subr.mxu0 0.0
        %v836 = vand.u32 %v371, 4294901760
        %837 = vmatpush1.msra.mxu0 %v836
        %838 = vmatprep.subr.mxu0 0.0
        %v839 = vand.u32 %v370, 4294901760
        %840 = vmatpush1.msra.mxu0 %v839
        %841 = vmatprep.subr.mxu0 0.0
        %v842 = vand.u32 %v369, 4294901760
        %843 = vmatpush1.msra.mxu0 %v842
        %844 = vmatprep.subr.mxu0 0.0
        %v845 = vand.u32 %v368, 4294901760
        %846 = vmatpush1.msra.mxu0 %v845
        %847 = vmatprep.subr.mxu0 0.0
        %v848 = vand.u32 %v367, 4294901760
        %849 = vmatpush1.msra.mxu0 %v848
        %850 = vmatprep.subr.mxu0 0.0
        %851 = vmatpush2.msra.mxu0 0.0
        %852 = vmatprep.subr.mxu0 0.0
        %853 = vmatpush2.msra.mxu0 0.0
        %854 = vmatprep.subr.mxu0 0.0
        %855 = vmatpush2.msra.mxu0 0.0
        %856 = vmatprep.subr.mxu0 0.0
        %857 = vmatpush2.msra.mxu0 0.0
        %858 = vmatprep.subr.mxu0 0.0
        %859 = vmatpush2.msra.mxu0 0.0
        %860 = vmatprep.subr.mxu0 0.0
        %861 = vmatpush2.msra.mxu0 0.0
        %862 = vmatprep.subr.mxu0 0.0
        %863 = vmatpush2.msra.mxu0 0.0
        %864 = vmatprep.subr.mxu0 0.0
        %865 = vmatpush2.msra.mxu0 0.0
        %866 = vmatprep.subr.mxu0 0.0
        %867 = vmatpush2.msra.mxu0 0.0
        %868 = vmatprep.subr.mxu0 0.0
        %869 = vmatpush2.msra.mxu0 0.0
        %870 = vmatprep.subr.mxu0 0.0
        %871 = vmatpush2.msra.mxu0 0.0
        %872 = vmatprep.subr.mxu0 0.0
        %873 = vmatpush2.msra.mxu0 0.0
        %874 = vmatprep.subr.mxu0 0.0
        %875 = vmatpush2.msra.mxu0 0.0
        %876 = vmatprep.subr.mxu0 0.0
        %877 = vmatpush2.msra.mxu0 0.0
        %878 = vmatprep.subr.mxu0 0.0
        %879 = vmatpush2.msra.mxu0 0.0
        %880 = vmatprep.subr.mxu0 0.0
        %881 = vmatpush2.msra.mxu0 0.0
        %882 = vmatprep.mubr.f32.mxu0 0.0
        %883 = vmatmul.mubr.f32.gmra.mxu0 0.0
        %v884 = vpop.f32.mrf.mxu0
        %v885 = vadd.f32 %v799, %v884
        %v886 = vpop.f32.mrf.mxu0
        %887 = vdwg.mxu0
        %888 = vmatprep.subr.mxu0 0.0
        %v889 = vand.u32 %v382, 4294901760
        %v890 = vsub.f32 %v382, %v889
        %v891 = vand.u32 %v890, 4294901760
        %892 = vmatpush1.msra.mxu0 %v891
        %893 = vmatprep.subr.mxu0 0.0
        %v894 = vand.u32 %v381, 4294901760
        %v895 = vsub.f32 %v381, %v894
        %v896 = vand.u32 %v895, 4294901760
        %897 = vmatpush1.msra.mxu0 %v896
        %898 = vmatprep.subr.mxu0 0.0
        %v899 = vand.u32 %v380, 4294901760
        %v900 = vsub.f32 %v380, %v899
        %v901 = vand.u32 %v900, 4294901760
        %902 = vmatpush1.msra.mxu0 %v901
        %903 = vmatprep.subr.mxu0 0.0
        %v904 = vand.u32 %v379, 4294901760
        %v905 = vsub.f32 %v379, %v904
        %v906 = vand.u32 %v905, 4294901760
        %907 = vmatpush1.msra.mxu0 %v906
        %908 = vmatprep.subr.mxu0 0.0
        %v909 = vand.u32 %v378, 4294901760
        %v910 = vsub.f32 %v378, %v909
        %v911 = vand.u32 %v910, 4294901760
        %912 = vmatpush1.msra.mxu0 %v911
        %913 = vmatprep.subr.mxu0 0.0
        %v914 = vand.u32 %v377, 4294901760
        %v915 = vsub.f32 %v377, %v914
        %v916 = vand.u32 %v915, 4294901760
        %917 = vmatpush1.msra.mxu0 %v916
        %918 = vmatprep.subr.mxu0 0.0
        %v919 = vand.u32 %v376, 4294901760
        %v920 = vsub.f32 %v376, %v919
        %v921 = vand.u32 %v920, 4294901760
        %922 = vmatpush1.msra.mxu0 %v921
        %923 = vmatprep.subr.mxu0 0.0
        %v924 = vand.u32 %v375, 4294901760
        %v925 = vsub.f32 %v375, %v924
        %v926 = vand.u32 %v925, 4294901760
        %927 = vmatpush1.msra.mxu0 %v926
        %928 = vmatprep.subr.mxu0 0.0
        %v929 = vand.u32 %v374, 4294901760
        %v930 = vsub.f32 %v374, %v929
        %v931 = vand.u32 %v930, 4294901760
        %932 = vmatpush1.msra.mxu0 %v931
        %933 = vmatprep.subr.mxu0 0.0
        %v934 = vand.u32 %v373, 4294901760
        %v935 = vsub.f32 %v373, %v934
        %v936 = vand.u32 %v935, 4294901760
        %937 = vmatpush1.msra.mxu0 %v936
        %938 = vmatprep.subr.mxu0 0.0
        %v939 = vand.u32 %v372, 4294901760
        %v940 = vsub.f32 %v372, %v939
        %v941 = vand.u32 %v940, 4294901760
        %942 = vmatpush1.msra.mxu0 %v941
        %943 = vmatprep.subr.mxu0 0.0
        %v944 = vand.u32 %v371, 4294901760
        %v945 = vsub.f32 %v371, %v944
        %v946 = vand.u32 %v945, 4294901760
        %947 = vmatpush1.msra.mxu0 %v946
        %948 = vmatprep.subr.mxu0 0.0
        %v949 = vand.u32 %v370, 4294901760
        %v950 = vsub.f32 %v370, %v949
        %v951 = vand.u32 %v950, 4294901760
        %952 = vmatpush1.msra.mxu0 %v951
        %953 = vmatprep.subr.mxu0 0.0
        %v954 = vand.u32 %v369, 4294901760
        %v955 = vsub.f32 %v369, %v954
        %v956 = vand.u32 %v955, 4294901760
        %957 = vmatpush1.msra.mxu0 %v956
        %958 = vmatprep.subr.mxu0 0.0
        %v959 = vand.u32 %v368, 4294901760
        %v960 = vsub.f32 %v368, %v959
        %v961 = vand.u32 %v960, 4294901760
        %962 = vmatpush1.msra.mxu0 %v961
        %963 = vmatprep.subr.mxu0 0.0
        %v964 = vand.u32 %v367, 4294901760
        %v965 = vsub.f32 %v367, %v964
        %v966 = vand.u32 %v965, 4294901760
        %967 = vmatpush1.msra.mxu0 %v966
        %968 = vmatprep.subr.mxu0 0.0
        %969 = vmatpush2.msra.mxu0 0.0
        %970 = vmatprep.subr.mxu0 0.0
        %971 = vmatpush2.msra.mxu0 0.0
        %972 = vmatprep.subr.mxu0 0.0
        %973 = vmatpush2.msra.mxu0 0.0
        %974 = vmatprep.subr.mxu0 0.0
        %975 = vmatpush2.msra.mxu0 0.0
        %976 = vmatprep.subr.mxu0 0.0
        %977 = vmatpush2.msra.mxu0 0.0
        %978 = vmatprep.subr.mxu0 0.0
        %979 = vmatpush2.msra.mxu0 0.0
        %980 = vmatprep.subr.mxu0 0.0
        %981 = vmatpush2.msra.mxu0 0.0
        %982 = vmatprep.subr.mxu0 0.0
        %983 = vmatpush2.msra.mxu0 0.0
        %984 = vmatprep.subr.mxu0 0.0
        %985 = vmatpush2.msra.mxu0 0.0
        %986 = vmatprep.subr.mxu0 0.0
        %987 = vmatpush2.msra.mxu0 0.0
        %988 = vmatprep.subr.mxu0 0.0
        %989 = vmatpush2.msra.mxu0 0.0
        %990 = vmatprep.subr.mxu0 0.0
        %991 = vmatpush2.msra.mxu0 0.0
        %992 = vmatprep.subr.mxu0 0.0
        %993 = vmatpush2.msra.mxu0 0.0
        %994 = vmatprep.subr.mxu0 0.0
        %995 = vmatpush2.msra.mxu0 0.0
        %996 = vmatprep.subr.mxu0 0.0
        %997 = vmatpush2.msra.mxu0 0.0
        %998 = vmatprep.subr.mxu0 0.0
        %999 = vmatpush2.msra.mxu0 0.0
        %1000 = vmatprep.mubr.f32.mxu0 0.0
        %1001 = vmatmul.mubr.f32.gmra.mxu0 1.0
        %v1002 = vpop.f32.mrf.mxu0
        %v1003 = vadd.f32 %v885, %v1002
        %v1004 = vpop.f32.mrf.mxu0
        %1005 = vdwg.mxu0
        %1006 = vmatprep.subr.mxu0 0.0
        %v1007 = vand.u32 %v382, 4294901760
        %1008 = vmatpush1.msra.mxu0 %v1007
        %1009 = vmatprep.subr.mxu0 0.0
        %v1010 = vand.u32 %v381, 4294901760
        %1011 = vmatpush1.msra.mxu0 %v1010
        %1012 = vmatprep.subr.mxu0 0.0
        %v1013 = vand.u32 %v380, 4294901760
        %1014 = vmatpush1.msra.mxu0 %v1013
        %1015 = vmatprep.subr.mxu0 0.0
        %v1016 = vand.u32 %v379, 4294901760
        %1017 = vmatpush1.msra.mxu0 %v1016
        %1018 = vmatprep.subr.mxu0 0.0
        %v1019 = vand.u32 %v378, 4294901760
        %1020 = vmatpush1.msra.mxu0 %v1019
        %1021 = vmatprep.subr.mxu0 0.0
        %v1022 = vand.u32 %v377, 4294901760
        %1023 = vmatpush1.msra.mxu0 %v1022
        %1024 = vmatprep.subr.mxu0 0.0
        %v1025 = vand.u32 %v376, 4294901760
        %1026 = vmatpush1.msra.mxu0 %v1025
        %1027 = vmatprep.subr.mxu0 0.0
        %v1028 = vand.u32 %v375, 4294901760
        %1029 = vmatpush1.msra.mxu0 %v1028
        %1030 = vmatprep.subr.mxu0 0.0
        %v1031 = vand.u32 %v374, 4294901760
        %1032 = vmatpush1.msra.mxu0 %v1031
        %1033 = vmatprep.subr.mxu0 0.0
        %v1034 = vand.u32 %v373, 4294901760
        %1035 = vmatpush1.msra.mxu0 %v1034
        %1036 = vmatprep.subr.mxu0 0.0
        %v1037 = vand.u32 %v372, 4294901760
        %1038 = vmatpush1.msra.mxu0 %v1037
        %1039 = vmatprep.subr.mxu0 0.0
        %v1040 = vand.u32 %v371, 4294901760
        %1041 = vmatpush1.msra.mxu0 %v1040
        %1042 = vmatprep.subr.mxu0 0.0
        %v1043 = vand.u32 %v370, 4294901760
        %1044 = vmatpush1.msra.mxu0 %v1043
        %1045 = vmatprep.subr.mxu0 0.0
        %v1046 = vand.u32 %v369, 4294901760
        %1047 = vmatpush1.msra.mxu0 %v1046
        %1048 = vmatprep.subr.mxu0 0.0
        %v1049 = vand.u32 %v368, 4294901760
        %1050 = vmatpush1.msra.mxu0 %v1049
        %1051 = vmatprep.subr.mxu0 0.0
        %v1052 = vand.u32 %v367, 4294901760
        %1053 = vmatpush1.msra.mxu0 %v1052
        %1054 = vmatprep.subr.mxu0 0.0
        %1055 = vmatpush2.msra.mxu0 0.0
        %1056 = vmatprep.subr.mxu0 0.0
        %1057 = vmatpush2.msra.mxu0 0.0
        %1058 = vmatprep.subr.mxu0 0.0
        %1059 = vmatpush2.msra.mxu0 0.0
        %1060 = vmatprep.subr.mxu0 0.0
        %1061 = vmatpush2.msra.mxu0 0.0
        %1062 = vmatprep.subr.mxu0 0.0
        %1063 = vmatpush2.msra.mxu0 0.0
        %1064 = vmatprep.subr.mxu0 0.0
        %1065 = vmatpush2.msra.mxu0 0.0
        %1066 = vmatprep.subr.mxu0 0.0
        %1067 = vmatpush2.msra.mxu0 0.0
        %1068 = vmatprep.subr.mxu0 0.0
        %1069 = vmatpush2.msra.mxu0 0.0
        %1070 = vmatprep.subr.mxu0 0.0
        %1071 = vmatpush2.msra.mxu0 0.0
        %1072 = vmatprep.subr.mxu0 0.0
        %1073 = vmatpush2.msra.mxu0 0.0
        %1074 = vmatprep.subr.mxu0 0.0
        %1075 = vmatpush2.msra.mxu0 0.0
        %1076 = vmatprep.subr.mxu0 0.0
        %1077 = vmatpush2.msra.mxu0 0.0
        %1078 = vmatprep.subr.mxu0 0.0
        %1079 = vmatpush2.msra.mxu0 0.0
        %1080 = vmatprep.subr.mxu0 0.0
        %1081 = vmatpush2.msra.mxu0 0.0
        %1082 = vmatprep.subr.mxu0 0.0
        %1083 = vmatpush2.msra.mxu0 0.0
        %1084 = vmatprep.subr.mxu0 0.0
        %1085 = vmatpush2.msra.mxu0 0.0
        %1086 = vmatprep.mubr.f32.mxu0 0.0
        %1087 = vmatmul.mubr.f32.gmra.mxu0 1.0
        %v1088 = vpop.f32.mrf.mxu0
        %v1089 = vadd.f32 %v1003, %v1088
        %v1090 = vpop.f32.mrf.mxu0
        %1091 = vdwg.mxu0
        %s1092 = scalar_lea.vmem [#allocation2], %s21
        %v1093 = vld [vmem:[%s1092] sm:$0x1]
        %v1094 = vadd.f32 %v1093, %v1089
        %1095 = vst [vmem:[%s1092] sm:$0x1] %v1094
        %s1096 = sadd.s32 %s151, 128
        %p1097 = scmp.lt.s32.totalorder %s150, %s1096
        %s1098 = sadd.s32 %s150, 128
        %p1099 = scmp.lt.s32.totalorder %s151, %s1098
        %p1100 = pnand %p1097, %p1099
        %p1101 = pneg %p1100
        %p1102 = scmp.lt.s32.totalorder %s150, 200
        %p1103 = pnand %p1101, %p1102
        %p1104 = pneg %p1103
        %p1105 = scmp.lt.s32.totalorder %s151, 200
        %p1106 = pnand %p1104, %p1105
        %p1107 = pneg %p1106
        // Predicated region
        $region37: #{tpu_custom_call.1} parent=23 // pred_check
          _
        $region38: #{tpu_custom_call.1} parent=23 // pred_check_branch
          %1109 = sbr.rel (%p1106) target = $region40
        $region39: #{tpu_custom_call.1} parent=23 // pred_region
          %vm1110 = vcmp.eq.s32.totalorder %v280, %v315
          %vm1111 = vcmp.eq.s32.totalorder %v281, %v315
          %vm1112 = vcmp.eq.s32.totalorder %v282, %v315
          %vm1113 = vcmp.eq.s32.totalorder %v283, %v315
          %vm1114 = vcmp.eq.s32.totalorder %v284, %v315
          %vm1115 = vcmp.eq.s32.totalorder %v285, %v315
          %vm1116 = vcmp.eq.s32.totalorder %v286, %v315
          %vm1117 = vcmp.eq.s32.totalorder %v287, %v315
          %vm1118 = vcmp.eq.s32.totalorder %v288, %v315
          %vm1119 = vcmp.eq.s32.totalorder %v289, %v315
          %vm1120 = vcmp.eq.s32.totalorder %v290, %v315
          %vm1121 = vcmp.eq.s32.totalorder %v291, %v315
          %vm1122 = vcmp.eq.s32.totalorder %v292, %v315
          %vm1123 = vcmp.eq.s32.totalorder %v293, %v315
          %vm1124 = vcmp.eq.s32.totalorder %v294, %v315
          %vm1125 = vcmp.eq.s32.totalorder %v295, %v315
          %vm1126 = vmand %vm1110, %vm296
          %vm1127 = vmand %vm1111, %vm297
          %vm1128 = vmand %vm1112, %vm298
          %vm1129 = vmand %vm1113, %vm299
          %vm1130 = vmand %vm1114, %vm300
          %vm1131 = vmand %vm1115, %vm301
          %vm1132 = vmand %vm1116, %vm302
          %vm1133 = vmand %vm1117, %vm303
          %vm1134 = vmand %vm1118, %vm304
          %vm1135 = vmand %vm1119, %vm305
          %vm1136 = vmand %vm1120, %vm306
          %vm1137 = vmand %vm1121, %vm307
          %vm1138 = vmand %vm1122, %vm308
          %vm1139 = vmand %vm1123, %vm309
          %vm1140 = vmand %vm1124, %vm310
          %vm1141 = vmand %vm1125, %vm311
          %v1142 = vld [vmem:[#allocation7] sm:$0x1]
          %v1143 = vsel %vm1126, %v198, 0.0
          %v1144 = vsel %vm1127, %v199, 0.0
          %v1145 = vsel %vm1128, %v200, 0.0
          %v1146 = vsel %vm1129, %v201, 0.0
          %v1147 = vsel %vm1130, %v202, 0.0
          %v1148 = vsel %vm1131, %v203, 0.0
          %v1149 = vsel %vm1132, %v204, 0.0
          %v1150 = vsel %vm1133, %v205, 0.0
          %v1151 = vsel %vm1134, %v206, 0.0
          %v1152 = vsel %vm1135, %v207, 0.0
          %v1153 = vsel %vm1136, %v208, 0.0
          %v1154 = vsel %vm1137, %v209, 0.0
          %v1155 = vsel %vm1138, %v210, 0.0
          %v1156 = vsel %vm1139, %v211, 0.0
          %v1157 = vsel %vm1140, %v212, 0.0
          %v1158 = vsel %vm1141, %v213, 0.0
          %v1159 = vadd.f32 %v1143, %v1144
          %v1160 = vadd.f32 %v1159, %v1145
          %v1161 = vadd.f32 %v1160, %v1146
          %v1162 = vadd.f32 %v1161, %v1147
          %v1163 = vadd.f32 %v1162, %v1148
          %v1164 = vadd.f32 %v1163, %v1149
          %v1165 = vadd.f32 %v1164, %v1150
          %v1166 = vadd.f32 %v1165, %v1151
          %v1167 = vadd.f32 %v1166, %v1152
          %v1168 = vadd.f32 %v1167, %v1153
          %v1169 = vadd.f32 %v1168, %v1154
          %v1170 = vadd.f32 %v1169, %v1155
          %v1171 = vadd.f32 %v1170, %v1156
          %v1172 = vadd.f32 %v1171, %v1157
          %v1173 = vadd.f32 %v1172, %v1158
          %1174 = vadd.xlane.f32.xlu0 %v1173
          %v1175 = vpop.xlane.xlu0 %1174
          %v1176 = vrot.slane %v1175, 4
          %v1177 = vadd.f32 %v1175, %v1176
          %v1178 = vrot.slane %v1177, 2
          %v1179 = vadd.f32 %v1177, %v1178
          %v1180 = vrot.slane %v1179, 1
          %v1181 = vadd.f32 %v1179, %v1180
          %s1182 = vtos %v1181
          %s1183 = smul.f32 %s1182, -2.0
          %v1184 = vstv %s1183
          %v1185 = vadd.f32 %v1142, %v1184
          %vm1186 = vcmask 0
          %1187 = vst.msk [vmem:[#allocation7] sm:$0x1] %vm1186, %v1185
        $region40: #{tpu_custom_call.1} parent=23 // pred_fallthru
          _
        %p1188 = scmp.eq.s32.totalorder %s21, 1
        %p1189 = pnand %p1188, %p1102
        %p1190 = pneg %p1189
        // Predicated region
        $region41: #{tpu_custom_call.1} parent=23 // pred_check
          _
        $region42: #{tpu_custom_call.1} parent=23 // pred_check_branch
          %1192 = sbr.rel (%p1189) target = $region44
        $region43: #{tpu_custom_call.1} parent=23 // pred_region
          %v1193 = vld [vmem:[#allocation3] sm:$0xff]
          %v1194 = vld [vmem:[#allocation3 + $0x8] sm:$0xff]
          %v1195 = vld [vmem:[#allocation3 + $0x10] sm:$0xff]
          %v1196 = vld [vmem:[#allocation3 + $0x18] sm:$0xff]
          %v1197 = vld [vmem:[#allocation3 + $0x20] sm:$0xff]
          %v1198 = vld [vmem:[#allocation3 + $0x28] sm:$0xff]
          %v1199 = vld [vmem:[#allocation3 + $0x30] sm:$0xff]
          %v1200 = vld [vmem:[#allocation3 + $0x38] sm:$0xff]
          %v1201 = vld [vmem:[#allocation3 + $0x40] sm:$0xff]
          %v1202 = vld [vmem:[#allocation3 + $0x48] sm:$0xff]
          %v1203 = vld [vmem:[#allocation3 + $0x50] sm:$0xff]
          %v1204 = vld [vmem:[#allocation3 + $0x58] sm:$0xff]
          %v1205 = vld [vmem:[#allocation3 + $0x60] sm:$0xff]
          %v1206 = vld [vmem:[#allocation3 + $0x68] sm:$0xff]
          %v1207 = vld [vmem:[#allocation3 + $0x70] sm:$0xff]
          %v1208 = vld [vmem:[#allocation3 + $0x78] sm:$0xff]
          %v1209 = vlog2.pop %v1193
          %v1210 = vmul.f32 %v1209, 0.6931472
          %v1211 = vlog2.pop %v1194
          %v1212 = vmul.f32 %v1211, 0.6931472
          %v1213 = vlog2.pop %v1195
          %v1214 = vmul.f32 %v1213, 0.6931472
          %v1215 = vlog2.pop %v1196
          %v1216 = vmul.f32 %v1215, 0.6931472
          %v1217 = vlog2.pop %v1197
          %v1218 = vmul.f32 %v1217, 0.6931472
          %v1219 = vlog2.pop %v1198
          %v1220 = vmul.f32 %v1219, 0.6931472
          %v1221 = vlog2.pop %v1199
          %v1222 = vmul.f32 %v1221, 0.6931472
          %v1223 = vlog2.pop %v1200
          %v1224 = vmul.f32 %v1223, 0.6931472
          %v1225 = vlog2.pop %v1201
          %v1226 = vmul.f32 %v1225, 0.6931472
          %v1227 = vlog2.pop %v1202
          %v1228 = vmul.f32 %v1227, 0.6931472
          %v1229 = vlog2.pop %v1203
          %v1230 = vmul.f32 %v1229, 0.6931472
          %v1231 = vlog2.pop %v1204
          %v1232 = vmul.f32 %v1231, 0.6931472
          %v1233 = vlog2.pop %v1205
          %v1234 = vmul.f32 %v1233, 0.6931472
          %v1235 = vlog2.pop %v1206
          %v1236 = vmul.f32 %v1235, 0.6931472
          %v1237 = vlog2.pop %v1207
          %v1238 = vmul.f32 %v1237, 0.6931472
          %v1239 = vlog2.pop %v1208
          %v1240 = vmul.f32 %v1239, 0.6931472
          %v1241 = vadd.f32 %v1210, 20.0
          %v1242 = vadd.f32 %v1212, 20.0
          %v1243 = vadd.f32 %v1214, 20.0
          %v1244 = vadd.f32 %v1216, 20.0
          %v1245 = vadd.f32 %v1218, 20.0
          %v1246 = vadd.f32 %v1220, 20.0
          %v1247 = vadd.f32 %v1222, 20.0
          %v1248 = vadd.f32 %v1224, 20.0
          %v1249 = vadd.f32 %v1226, 20.0
          %v1250 = vadd.f32 %v1228, 20.0
          %v1251 = vadd.f32 %v1230, 20.0
          %v1252 = vadd.f32 %v1232, 20.0
          %v1253 = vadd.f32 %v1234, 20.0
          %v1254 = vadd.f32 %v1236, 20.0
          %v1255 = vadd.f32 %v1238, 20.0
          %v1256 = vadd.f32 %v1240, 20.0
          %v1257 = vld [vmem:[#allocation7] sm:$0x1]
          %v1258 = vsel %vm296, %v1241, 0.0
          %v1259 = vsel %vm297, %v1242, 0.0
          %v1260 = vsel %vm298, %v1243, 0.0
          %v1261 = vsel %vm299, %v1244, 0.0
          %v1262 = vsel %vm300, %v1245, 0.0
          %v1263 = vsel %vm301, %v1246, 0.0
          %v1264 = vsel %vm302, %v1247, 0.0
          %v1265 = vsel %vm303, %v1248, 0.0
          %v1266 = vsel %vm304, %v1249, 0.0
          %v1267 = vsel %vm305, %v1250, 0.0
          %v1268 = vsel %vm306, %v1251, 0.0
          %v1269 = vsel %vm307, %v1252, 0.0
          %v1270 = vsel %vm308, %v1253, 0.0
          %v1271 = vsel %vm309, %v1254, 0.0
          %v1272 = vsel %vm310, %v1255, 0.0
          %v1273 = vsel %vm311, %v1256, 0.0
          %v1274 = vsel %vm447, %v1258, 0.0
          %v1275 = vsel %vm447, %v1259, 0.0
          %v1276 = vadd.f32 %v1274, %v1275
          %v1277 = vsel %vm447, %v1260, 0.0
          %v1278 = vadd.f32 %v1276, %v1277
          %v1279 = vsel %vm447, %v1261, 0.0
          %v1280 = vadd.f32 %v1278, %v1279
          %v1281 = vsel %vm447, %v1262, 0.0
          %v1282 = vadd.f32 %v1280, %v1281
          %v1283 = vsel %vm447, %v1263, 0.0
          %v1284 = vadd.f32 %v1282, %v1283
          %v1285 = vsel %vm447, %v1264, 0.0
          %v1286 = vadd.f32 %v1284, %v1285
          %v1287 = vsel %vm447, %v1265, 0.0
          %v1288 = vadd.f32 %v1286, %v1287
          %v1289 = vsel %vm447, %v1266, 0.0
          %v1290 = vadd.f32 %v1288, %v1289
          %v1291 = vsel %vm447, %v1267, 0.0
          %v1292 = vadd.f32 %v1290, %v1291
          %v1293 = vsel %vm447, %v1268, 0.0
          %v1294 = vadd.f32 %v1292, %v1293
          %v1295 = vsel %vm447, %v1269, 0.0
          %v1296 = vadd.f32 %v1294, %v1295
          %v1297 = vsel %vm447, %v1270, 0.0
          %v1298 = vadd.f32 %v1296, %v1297
          %v1299 = vsel %vm447, %v1271, 0.0
          %v1300 = vadd.f32 %v1298, %v1299
          %v1301 = vsel %vm447, %v1272, 0.0
          %v1302 = vadd.f32 %v1300, %v1301
          %v1303 = vsel %vm447, %v1273, 0.0
          %v1304 = vadd.f32 %v1302, %v1303
          %1305 = vadd.xlane.f32.xlu0 %v1304
          %v1306 = vpop.xlane.xlu0 %1305
          %v1307 = vrot.slane %v1306, 4
          %v1308 = vadd.f32 %v1306, %v1307
          %v1309 = vrot.slane %v1308, 2
          %v1310 = vadd.f32 %v1308, %v1309
          %v1311 = vrot.slane %v1310, 1
          %v1312 = vadd.f32 %v1310, %v1311
          %s1313 = vtos %v1312
          %v1314 = vstv %s1313
          %v1315 = vadd.f32 %v1257, %v1314
          %vm1316 = vcmask 0
          %1317 = vst.msk [vmem:[#allocation7] sm:$0x1] %vm1316, %v1315
        $region44: #{tpu_custom_call.1} parent=23 // pred_fallthru
          _
        %p1318 = scmp.eq.s32.totalorder %s20, 1
        %p1319 = pnand %p1318, %p1105
        %p1320 = pneg %p1319
        // Predicated region
        $region45: #{tpu_custom_call.1} parent=23 // pred_check
          _
        $region46: #{tpu_custom_call.1} parent=23 // pred_check_branch
          %1322 = sbr.rel (%p1319) target = $region48
        $region47: #{tpu_custom_call.1} parent=23 // pred_region
          %v1323 = vld [vmem:[%s1092] sm:$0x1]
          %v1324 = vlog2.pop %v1323
          %v1325 = vmul.f32 %v1324, 0.6931472
          %v1326 = vadd.f32 %v1325, 20.0
          %v1327 = vld [vmem:[#allocation7] sm:$0x1]
          %v1328 = vsel %vm316, %v1326, 0.0
          %vm1329 = vcmask 1040384
          %v1330 = vsel %vm1329, %v1328, 0.0
          %1331 = vadd.xlane.f32.xlu0 %v1330
          %v1332 = vpop.xlane.xlu0 %1331
          %v1333 = vrot.slane %v1332, 4
          %v1334 = vadd.f32 %v1332, %v1333
          %v1335 = vrot.slane %v1334, 2
          %v1336 = vadd.f32 %v1334, %v1335
          %v1337 = vrot.slane %v1336, 1
          %v1338 = vadd.f32 %v1336, %v1337
          %s1339 = vtos %v1338
          %v1340 = vstv %s1339
          %v1341 = vadd.f32 %v1327, %v1340
          %vm1342 = vcmask 0
          %1343 = vst.msk [vmem:[#allocation7] sm:$0x1] %vm1342, %v1341
        $region48: #{tpu_custom_call.1} parent=23 // pred_fallthru
          _
        %p1344 = pnand %p1318, %p1188
        %p1345 = pneg %p1344
        // Predicated region
        $region49: #{tpu_custom_call.1} parent=23 // pred_check
          _
        $region50: #{tpu_custom_call.1} parent=23 // pred_check_branch
          %1347 = sbr.rel (%p1344) target = $region52
        $region51: #{tpu_custom_call.1} parent=23 // pred_region
          %v1348 = vld [vmem:[#allocation7] sm:$0x1]
          %v1349 = vmul.f32 %v1348, 0.005
          %vm1350 = vcmask 0
          %1351 = vst.msk [vmem:[#allocation7] sm:$0x1] %vm1350, %v1349
        $region52: #{tpu_custom_call.1} parent=23 // pred_fallthru
          _
        // Predicated region
        $region53: #{tpu_custom_call.1} parent=23 // pred_check
          %p1352 = pneg %p69
        $region54: #{tpu_custom_call.1} parent=23 // pred_check_branch
          %1354 = sbr.rel (%p1352) target = $region56
        $region55: #{tpu_custom_call.1} parent=23 // pred_region
          %s1356 = ssub.s32 16, 16
          %1357 = vsyncadd [#allocation6], %s1356
          %s1359 = sshll.u32 [#allocation7], 4
          %s1360 = int_to_ptr.vmem [resolvable:$true] %s1359
          %1362 = dma.vmem_to_hbm [thread:$0]  %s1360, 16, %s1, [#allocation6]
        $region56: #{tpu_custom_call.1} parent=23 // pred_fallthru
          _
        // Predicated region
        $region57: #{tpu_custom_call.1} parent=23 // pred_check
          %p1363 = pneg %p69
        $region58: #{tpu_custom_call.1} parent=23 // pred_check_branch
          %1365 = sbr.rel (%p1363) target = $region60
        $region59: #{tpu_custom_call.1} parent=23 // pred_region
          %1366 = dma.done [#allocation6], 16
        $region60: #{tpu_custom_call.1} parent=23 // pred_fallthru
          _
      $region24: #{tpu_custom_call.1} parent=5 // pred_fallthru
        _
      %p1367 = scmp.le.s32.totalorder 2, %s11
      // Predicated region
      $region61: #{tpu_custom_call.1} parent=5 // pred_check
        %p1368 = pneg %p1367
      $region62: #{tpu_custom_call.1} parent=5 // pred_check_branch
        %1370 = sbr.rel (%p1368) target = $region64
      $region63: #{tpu_custom_call.1} parent=5 // pred_region
        %s1371 = ssub.s32 %s11, 2
      $region64: #{tpu_custom_call.1} parent=5 // pred_fallthru
        _
    $region6: #{tpu_custom_call.1} parent=1 // loop_footer
      %s15 = sadd.s32 1, %s11
    $region7: #{tpu_custom_call.1} parent=1 // loop_footer_branch
      %10 = sbr.rel target = $region3
    $region8: #{tpu_custom_call.1} parent=1 // loop_exit
      _
    %1372 = vsyncpa [#allocation5], 1
    %s1373 = scalar_lea.sflag [#allocation5], 1
    %1374 = vsyncpa %s1373, 1
    %1375 = vsyncpa [#allocation6], 1
    %s1376 = scalar_lea.sflag [#allocation6], 1
    %1377 = vsyncpa %s1376, 1

</llo_original>
